<compile_context>
chip_gen: v6e
topology: v6e:2x2x1
jax: 0.10.0
libtpu: 0.0.40
codegen_flags: <defaults>
</compile_context>

<pallas_src>
import functools

import jax
import jax.numpy as jnp
from jax import lax
from jax.experimental import pallas as pl
from jax.experimental.pallas import tpu as pltpu


# ------------------------------ Fused kernel -------------------------------- #
#
# Internal activation layout: rows are time-major, u = s*B + b  (M = S*B rows,
# D lanes).  The head-split ("q_cat") row order is n = j*M + u, where j is the
# Dh-wide lane chunk.  Which rows belong to the same (batch, head) group — and
# therefore which score entries are allowed — is encoded in the additive
# `mask` bias computed once in the wrapper.

def _encoder_kernel(x0_ref, mask_ref,
                    wqkv_ref, bqkv_ref, wo_ref, bo_ref,
                    wihx_ref, wiha_ref, whh_ref, blstm_ref,
                    out_ref, last_ref, dist_ref,
                    carry_ref, *, B, S, D, H):
    Dh = D // H
    M = B * S
    nb = pl.program_id(0)

    # Block 0 starts from the embedded input; later blocks start from the
    # previous block's LSTM output, carried in VMEM scratch.
    @pl.when(nb == 0)
    def _init():
        carry_ref[...] = x0_ref[...]

    x2 = carry_ref[...]                      # (M, D) f32, time-major rows
    x2b = x2.astype(jnp.bfloat16)

    # ---- fused Q/K/V projection: one MXU matmul, bf16 operands / f32 acc ----
    qkv = (jnp.dot(x2b, wqkv_ref[0], preferred_element_type=jnp.float32)
           + bqkv_ref[0])                    # (M, 3D) f32

    # ---- PyTorch raw head-split reshape as lane-chunk -> sublane concat ----
    def chunks(base):
        return jnp.concatenate(
            [qkv[:, base + j * Dh: base + (j + 1) * Dh] for j in range(H)],
            axis=0)                          # (H*M, Dh)
    q_cat = chunks(0)
    k_cat = chunks(D)
    v_cat = chunks(2 * D)

    # ---- scores for ALL batches & heads in ONE matmul; quirky scale 2/Dh ----
    scores = lax.dot_general(q_cat, k_cat, (((1,), (1,)), ((), ())),
                             preferred_element_type=jnp.float32)   # (H*M, H*M)
    scores = scores * (2.0 / Dh) + mask_ref[...]   # -1e30 on cross-group pairs
    scores = scores - jnp.max(scores, axis=-1, keepdims=True)
    e = jnp.exp(scores)
    p = e / jnp.sum(e, axis=-1, keepdims=True)     # exact softmax over each head
    dist_ref[...] = p                              # last block's value is flushed

    attn_cat = jnp.dot(p, v_cat, preferred_element_type=jnp.float32)  # (H*M, Dh)

    # ---- merge heads + output projection (weight pre-split per lane chunk) ----
    attn_out = bo_ref[0]                     # (1, D), broadcasts
    for j in range(H):
        attn_out = attn_out + jnp.dot(
            attn_cat[j * M:(j + 1) * M, :].astype(jnp.bfloat16),
            wo_ref[0, j], preferred_element_type=jnp.float32)          # (M, D)

    # ---- LSTM: input projection hoisted out of the recurrence ----
    #   concat([x, attn_out]) @ Wih^T == x @ Wih_x + attn_out @ Wih_a
    gx = (jnp.dot(x2b, wihx_ref[0], preferred_element_type=jnp.float32)
          + jnp.dot(attn_out.astype(jnp.bfloat16), wiha_ref[0],
                    preferred_element_type=jnp.float32)
          + blstm_ref[0])                    # (M, 4D) f32,  b = b_ih + b_hh

    whh = whh_ref[0]                         # (D, 4D) bf16
    h = jnp.zeros((B, D), jnp.float32)
    c = jnp.zeros((B, D), jnp.float32)
    for t in range(S):                       # static unroll; S is small & fixed
        g = (gx[t * B:(t + 1) * B, :]
             + jnp.dot(h.astype(jnp.bfloat16), whh,
                       preferred_element_type=jnp.float32))            # (B, 4D)
        # PyTorch gate order: i, f, g, o
        i_g = jax.nn.sigmoid(g[:, 0:D])
        f_g = jax.nn.sigmoid(g[:, D:2 * D])
        g_g = jnp.tanh(g[:, 2 * D:3 * D])
        o_g = jax.nn.sigmoid(g[:, 3 * D:4 * D])
        c = f_g * c + i_g * g_g
        h = o_g * jnp.tanh(c)
        carry_ref[pl.ds(t * B, B), :] = h    # all_state row u = t*B + b

    last_ref[...] = h                        # (B, D)
    out_ref[...] = carry_ref[...]            # flushed to HBM once, at grid end


# --------------------------- Encoder forward (glue) -------------------------- #

def encoder_forward(x_ids, params, dim_model, num_head):
    D, H = dim_model, num_head
    Dh = D // H

    # Embedding lookup (gather) is XLA glue.
    emb = jnp.take(params["embed"], x_ids, axis=0)        # (B, S, D) f32
    # TODO(synk): nn.Dropout(p=0.1) on the embedding is applied as eval-mode
    # identity; training-mode stochastic masking is not reproduced.

    B, S, _ = emb.shape
    M = B * S
    R = H * M
    NB = len(params["blocks"])

    # ---- stack per-block weights along a leading num_block axis ----
    def stack(name, dt):
        return jnp.stack([blk[name] for blk in params["blocks"]]).astype(dt)

    wqkv = stack("wqkv_t", jnp.bfloat16)                       # (NB, D, 3D)
    wo = stack("wo_t", jnp.bfloat16).reshape(NB, H, Dh, D)     # pre-split rows
    wihx = stack("wih_x", jnp.bfloat16)                        # (NB, D, 4D)
    wiha = stack("wih_a", jnp.bfloat16)                        # (NB, D, 4D)
    whh = stack("whh_t", jnp.bfloat16)                         # (NB, D, 4D)
    bqkv = stack("bqkv", jnp.float32).reshape(NB, 1, 3 * D)
    bo = stack("bo", jnp.float32).reshape(NB, 1, D)
    blstm = stack("b_lstm", jnp.float32).reshape(NB, 1, 4 * D)

    # ---- time-major (S*B, D) input layout ----
    x0 = emb.transpose(1, 0, 2).reshape(M, D)

    # ---- additive mask encoding the raw-reshape head/batch grouping ----
    n = jnp.arange(R)
    u = n % M
    j = n // M
    b_of = u % B
    s_of = u // B
    h_of = (s_of * H + j) // S
    grp = b_of * H + h_of
    mask = jnp.where(grp[:, None] == grp[None, :], 0.0, -1e30).astype(jnp.float32)

    kernel = functools.partial(_encoder_kernel, B=B, S=S, D=D, H=H)

    flops_blk = (2 * M * D * 3 * D + 4 * R * R * Dh + 2 * M * D * D
                 + 4 * M * D * 4 * D + 2 * S * B * D * 4 * D)
    bytes_est = 4 * (M * D + R * R) + NB * (16 * D * D * 2 + 4 * 8 * D) \
        + 4 * (M * D + B * D + R * R)
    cost = pl.CostEstimate(flops=NB * flops_blk,
                           transcendentals=NB * (R * R + 5 * M * D),
                           bytes_accessed=bytes_est)

    out2, last2, p_full = pl.pallas_call(
        kernel,
        out_shape=(jax.ShapeDtypeStruct((M, D), jnp.float32),
                   jax.ShapeDtypeStruct((B, D), jnp.float32),
                   jax.ShapeDtypeStruct((R, R), jnp.float32)),
        grid=(NB,),
        in_specs=[
            pl.BlockSpec((M, D), lambda nb: (0, 0)),                 # x0
            pl.BlockSpec((R, R), lambda nb: (0, 0)),                 # mask
            pl.BlockSpec((1, D, 3 * D), lambda nb: (nb, 0, 0)),      # wqkv
            pl.BlockSpec((1, 1, 3 * D), lambda nb: (nb, 0, 0)),      # bqkv
            pl.BlockSpec((1, H, Dh, D), lambda nb: (nb, 0, 0, 0)),   # wo (split)
            pl.BlockSpec((1, 1, D), lambda nb: (nb, 0, 0)),          # bo
            pl.BlockSpec((1, D, 4 * D), lambda nb: (nb, 0, 0)),      # wih_x
            pl.BlockSpec((1, D, 4 * D), lambda nb: (nb, 0, 0)),      # wih_a
            pl.BlockSpec((1, D, 4 * D), lambda nb: (nb, 0, 0)),      # whh
            pl.BlockSpec((1, 1, 4 * D), lambda nb: (nb, 0, 0)),      # b_lstm
        ],
        out_specs=(pl.BlockSpec((M, D), lambda nb: (0, 0)),
                   pl.BlockSpec((B, D), lambda nb: (0, 0)),
                   pl.BlockSpec((R, R), lambda nb: (0, 0))),
        scratch_shapes=[pltpu.VMEM((M, D), jnp.float32)],
        compiler_params=pltpu.CompilerParams(
            dimension_semantics=("arbitrary",)),
        cost_estimate=cost,
    )(x0, mask, wqkv, bqkv, wo, bo, wihx, wiha, whh, blstm)

    # back to module layouts (tiny wrapper-side plumbing)
    out = out2.reshape(S, B, D).transpose(1, 0, 2)               # (B, S, D)
    last_state = last2[None]                                     # (1, B, D)

    # Gather the last block's (B,H,S,S) attention distribution out of the
    # lane-dense (R, R) row-space matrix.
    q_lin = jnp.arange(H)[:, None] * S + jnp.arange(S)[None, :]  # (H, S): h*S+i
    idx = ((q_lin % H) * M + (q_lin // H) * B
           + jnp.arange(B)[:, None, None])                       # (B, H, S)
    self_attn = p_full[idx[:, :, :, None], idx[:, :, None, :]]   # (B, H, S, S)

    return out, last_state, self_attn


# ----------------------------- Pure-JAX reference ---------------------------- #

def reference_forward(x_ids, params, dim_model, num_head):
    D = dim_model
    H = num_head
    Dh = D // H
    out = params["embed"][x_ids]
    last_state = None
    self_attn = None
    for blk in params["blocks"]:
        B, S, _ = out.shape
        flat = out.reshape(B * S, D)
        qkv = flat @ blk["wqkv_t"] + blk["bqkv"]
        q = qkv[:, :D].reshape(B, H, S, Dh)        # raw reshape (PyTorch quirk)
        k = qkv[:, D:2 * D].reshape(B, H, S, Dh)
        v = qkv[:, 2 * D:].reshape(B, H, S, Dh)
        s = jnp.einsum("bhqd,bhkd->bhqk", q, k) * (2.0 / Dh)
        p = jax.nn.softmax(s, axis=-1)
        self_attn = p
        attn = jnp.einsum("bhqk,bhkd->bhqd", p, v).reshape(B, S, D)
        attn = (attn.reshape(B * S, D) @ blk["wo_t"] + blk["bo"]).reshape(B, S, D)
        h = jnp.zeros((B, D), jnp.float32)
        c = jnp.zeros((B, D), jnp.float32)
        hs = []
        for t in range(S):
            gates = (out[:, t, :] @ blk["wih_x"] + attn[:, t, :] @ blk["wih_a"]
                     + h @ blk["whh_t"] + blk["b_lstm"])
            i_g = jax.nn.sigmoid(gates[:, :D])
            f_g = jax.nn.sigmoid(gates[:, D:2 * D])
            g_g = jnp.tanh(gates[:, 2 * D:3 * D])
            o_g = jax.nn.sigmoid(gates[:, 3 * D:])
            c = f_g * c + i_g * g_g
            h = o_g * jnp.tanh(c)
            hs.append(h)
        out = jnp.stack(hs, axis=1)
        last_state = h[None]
    return out, last_state, self_attn


# --------------------------------- Params ------------------------------------ #

def init_params(key, dim_model, num_block, num_head, len_dic):
    D = dim_model
    keys = jax.random.split(key, 1 + num_block)

    def w(k, shape, scale=0.1):
        return (jax.random.normal(k, shape, jnp.float32) * scale).astype(jnp.float32)

    params = {"embed": w(keys[0], (len_dic, D)), "blocks": []}
    for bi in range(num_block):
        ks = jax.random.split(keys[1 + bi], 9)
        blk = {
            # Linear weights stored pre-transposed (in, out); Q|K|V concatenated.
            "wqkv_t": w(ks[0], (D, 3 * D)), "bqkv": w(ks[1], (3 * D,)),
            "wo_t": w(ks[2], (D, D)), "bo": w(ks[3], (D,)),
            # LSTM weight_ih split into the two halves of the concat([Q, attn]) input.
            "wih_x": w(ks[4], (D, 4 * D)),
            "wih_a": w(ks[5], (D, 4 * D)),
            "whh_t": w(ks[6], (D, 4 * D)),
            "b_lstm": w(ks[7], (4 * D,)) + w(ks[8], (4 * D,)),  # b_ih + b_hh
        }
        params["blocks"].append(blk)
    return params


# ---------------------------------- Main -------------------------------------- #

if __name__ == "__main__":
    B, S = 2, 8
    dim_model, num_block, num_head, len_dic = 32, 2, 4, 50

    key = jax.random.PRNGKey(0)
    kp, kx = jax.random.split(key)
    params = init_params(kp, dim_model, num_block, num_head, len_dic)
    x_ids = jax.random.randint(kx, (B, S), 0, len_dic, dtype=jnp.int32)

    fwd = jax.jit(functools.partial(encoder_forward,
                                    dim_model=dim_model, num_head=num_head))
    out, last_state, self_attn = fwd(x_ids, params)
    (out, last_state, self_attn) = jax.block_until_ready((out, last_state, self_attn))

    assert out.shape == (B, S, dim_model)
    assert last_state.shape == (1, B, dim_model)
    assert self_attn.shape == (B, num_head, S, S)

    ref_out, ref_last, ref_attn = reference_forward(x_ids, params, dim_model, num_head)
    # Tolerance 2e-2: kernel uses bf16 weight-matmul operands (f32 accumulate)
    # while the reference is pure f32; observed error is a few 1e-3.
    for got, ref in ((out, ref_out), (last_state, ref_last), (self_attn, ref_attn)):
        err = float(jnp.max(jnp.abs(got - ref)))
        assert jnp.allclose(got, ref, atol=2e-2, rtol=2e-2), f"max abs err {err}"

    print("KERNEL_OK")
</pallas_src>

<mosaic_0001>
module attributes {stable_mosaic.version = 11 : i64} {
  func.func @_encoder_kernel(%arg0: i32, %arg1: memref<16x32xf32, #tpu.memory_space<vmem>>, %arg2: memref<64x64xf32, #tpu.memory_space<vmem>>, %arg3: memref<1x32x96xbf16, #tpu.memory_space<vmem>>, %arg4: memref<1x1x96xf32, #tpu.memory_space<vmem>>, %arg5: memref<1x4x8x32xbf16, #tpu.memory_space<vmem>>, %arg6: memref<1x1x32xf32, #tpu.memory_space<vmem>>, %arg7: memref<1x32x128xbf16, #tpu.memory_space<vmem>>, %arg8: memref<1x32x128xbf16, #tpu.memory_space<vmem>>, %arg9: memref<1x32x128xbf16, #tpu.memory_space<vmem>>, %arg10: memref<1x1x128xf32, #tpu.memory_space<vmem>>, %arg11: memref<16x32xf32, #tpu.memory_space<vmem>>, %arg12: memref<2x32xf32, #tpu.memory_space<vmem>>, %arg13: memref<64x64xf32, #tpu.memory_space<vmem>>, %arg14: memref<16x32xf32, #tpu.memory_space<vmem>>) attributes {dimension_semantics = [#tpu.dimension_semantics<arbitrary>], iteration_bounds = array<i64: 2>, scalar_prefetch = 0 : i64, scratch_operands = 1 : i64, tpu.core_type = #tpu.core_type<tc>, window_params = [{pipeline_mode = #tpu.pipeline_mode<synchronous>, transform_indices = @transform_0, window_bounds = array<i64: 16, 32>}, {pipeline_mode = #tpu.pipeline_mode<synchronous>, transform_indices = @transform_1, window_bounds = array<i64: 64, 64>}, {transform_indices = @transform_2, window_bounds = array<i64: 1, 32, 96>}, {transform_indices = @transform_3, window_bounds = array<i64: 1, 1, 96>}, {transform_indices = @transform_4, window_bounds = array<i64: 1, 4, 8, 32>}, {transform_indices = @transform_5, window_bounds = array<i64: 1, 1, 32>}, {transform_indices = @transform_6, window_bounds = array<i64: 1, 32, 128>}, {transform_indices = @transform_7, window_bounds = array<i64: 1, 32, 128>}, {transform_indices = @transform_8, window_bounds = array<i64: 1, 32, 128>}, {transform_indices = @transform_9, window_bounds = array<i64: 1, 1, 128>}, {pipeline_mode = #tpu.pipeline_mode<synchronous>, transform_indices = @transform_10, window_bounds = array<i64: 16, 32>}, {pipeline_mode = #tpu.pipeline_mode<synchronous>, transform_indices = @transform_11, window_bounds = array<i64: 2, 32>}, {pipeline_mode = #tpu.pipeline_mode<synchronous>, transform_indices = @transform_12, window_bounds = array<i64: 64, 64>}]} {
    %c0_i32 = arith.constant 0 : i32
    %0 = arith.cmpi eq, %arg0, %c0_i32 : i32
    %1 = arith.extui %0 : i1 to i32
    %c0_i32_0 = arith.constant 0 : i32
    %2 = arith.cmpi ne, %1, %c0_i32_0 : i32
    scf.if %2 {
      %c0_101 = arith.constant 0 : index
      %c0_102 = arith.constant 0 : index
      %329 = vector.load %arg1[%c0_101, %c0_102] : memref<16x32xf32, #tpu.memory_space<vmem>>, vector<16x32xf32>
      %c0_103 = arith.constant 0 : index
      %c0_104 = arith.constant 0 : index
      %330 = vector.load %arg14[%c0_103, %c0_104] : memref<16x32xf32, #tpu.memory_space<vmem>>, vector<16x32xf32>
      tpu.vector_store %arg14[%c0_103, %c0_104], %329 {strides = array<i32>} : memref<16x32xf32, #tpu.memory_space<vmem>>, vector<16x32xf32>,
    } else {
    }
    %c0 = arith.constant 0 : index
    %c0_1 = arith.constant 0 : index
    %3 = vector.load %arg14[%c0, %c0_1] : memref<16x32xf32, #tpu.memory_space<vmem>>, vector<16x32xf32>
    %4 = arith.truncf %3 : vector<16x32xf32> to vector<16x32xbf16>
    %c0_2 = arith.constant 0 : index
    %c0_3 = arith.constant 0 : index
    %c0_4 = arith.constant 0 : index
    %5 = vector.load %arg3[%c0_2, %c0_3, %c0_4] : memref<1x32x96xbf16, #tpu.memory_space<vmem>>, vector<1x32x96xbf16>
    %6 = vector.shape_cast %5 : vector<1x32x96xbf16> to vector<32x96xbf16>
    %cst = arith.constant dense<0.000000e+00> : vector<16x96xf32>
    %7 = tpu.matmul %4, %6, %cst {dimension_numbers = #tpu.dot_dimension_numbers<[1], [0], [0], [1], [0, 0, 1, 1], [], []>} : vector<16x32xbf16>, vector<32x96xbf16>, vector<16x96xf32> -> vector<16x96xf32>
    %c0_5 = arith.constant 0 : index
    %c0_6 = arith.constant 0 : index
    %c0_7 = arith.constant 0 : index
    %8 = vector.load %arg4[%c0_5, %c0_6, %c0_7] : memref<1x1x96xf32, #tpu.memory_space<vmem>>, vector<1x1x96xf32>
    %9 = vector.shape_cast %8 : vector<1x1x96xf32> to vector<1x96xf32>
    %10 = vector.broadcast %9 : vector<1x96xf32> to vector<16x96xf32>
    %11 = arith.addf %7, %10 : vector<16x96xf32>
    %12 = vector.extract_strided_slice %11 {offsets = [0, 0], sizes = [16, 8], strides = [1, 1]} : vector<16x96xf32> to vector<16x8xf32>
    %13 = vector.extract_strided_slice %11 {offsets = [0, 8], sizes = [16, 8], strides = [1, 1]} : vector<16x96xf32> to vector<16x8xf32>
    %14 = vector.extract_strided_slice %11 {offsets = [0, 16], sizes = [16, 8], strides = [1, 1]} : vector<16x96xf32> to vector<16x8xf32>
    %15 = vector.extract_strided_slice %11 {offsets = [0, 24], sizes = [16, 8], strides = [1, 1]} : vector<16x96xf32> to vector<16x8xf32>
    %16 = tpu.concatenate %12, %13, %14, %15 in 0 : vector<16x8xf32>, vector<16x8xf32>, vector<16x8xf32>, vector<16x8xf32> -> vector<64x8xf32>
    %17 = vector.extract_strided_slice %11 {offsets = [0, 32], sizes = [16, 8], strides = [1, 1]} : vector<16x96xf32> to vector<16x8xf32>
    %18 = vector.extract_strided_slice %11 {offsets = [0, 40], sizes = [16, 8], strides = [1, 1]} : vector<16x96xf32> to vector<16x8xf32>
    %19 = vector.extract_strided_slice %11 {offsets = [0, 48], sizes = [16, 8], strides = [1, 1]} : vector<16x96xf32> to vector<16x8xf32>
    %20 = vector.extract_strided_slice %11 {offsets = [0, 56], sizes = [16, 8], strides = [1, 1]} : vector<16x96xf32> to vector<16x8xf32>
    %21 = tpu.concatenate %17, %18, %19, %20 in 0 : vector<16x8xf32>, vector<16x8xf32>, vector<16x8xf32>, vector<16x8xf32> -> vector<64x8xf32>
    %22 = vector.extract_strided_slice %11 {offsets = [0, 64], sizes = [16, 8], strides = [1, 1]} : vector<16x96xf32> to vector<16x8xf32>
    %23 = vector.extract_strided_slice %11 {offsets = [0, 72], sizes = [16, 8], strides = [1, 1]} : vector<16x96xf32> to vector<16x8xf32>
    %24 = vector.extract_strided_slice %11 {offsets = [0, 80], sizes = [16, 8], strides = [1, 1]} : vector<16x96xf32> to vector<16x8xf32>
    %25 = vector.extract_strided_slice %11 {offsets = [0, 88], sizes = [16, 8], strides = [1, 1]} : vector<16x96xf32> to vector<16x8xf32>
    %26 = tpu.concatenate %22, %23, %24, %25 in 0 : vector<16x8xf32>, vector<16x8xf32>, vector<16x8xf32>, vector<16x8xf32> -> vector<64x8xf32>
    %cst_8 = arith.constant dense<0.000000e+00> : vector<64x64xf32>
    %27 = tpu.matmul %16, %21, %cst_8 {dimension_numbers = #tpu.dot_dimension_numbers<[1], [1], [0], [0], [0, 0, 1, 0], [], []>} : vector<64x8xf32>, vector<64x8xf32>, vector<64x64xf32> -> vector<64x64xf32>
    %cst_9 = arith.constant 2.500000e-01 : f32
    %28 = vector.broadcast %cst_9 : f32 to vector<64x64xf32>
    %29 = arith.mulf %27, %28 : vector<64x64xf32>
    %c0_10 = arith.constant 0 : index
    %c0_11 = arith.constant 0 : index
    %30 = vector.load %arg2[%c0_10, %c0_11] : memref<64x64xf32, #tpu.memory_space<vmem>>, vector<64x64xf32>
    %31 = arith.addf %29, %30 : vector<64x64xf32>
    %cst_12 = arith.constant dense<0xFF800000> : vector<64xf32>
    %32 = vector.multi_reduction <maximumf>, %31, %cst_12 [1] : vector<64x64xf32> to vector<64xf32>
    %33 = vector.shape_cast %32 : vector<64xf32> to vector<64x1xf32>
    %34 = vector.broadcast %33 : vector<64x1xf32> to vector<64x64xf32>
    %35 = arith.subf %31, %34 : vector<64x64xf32>
    %36 = math.exp %35 : vector<64x64xf32>
    %cst_13 = arith.constant dense<0.000000e+00> : vector<64xf32>
    %37 = vector.multi_reduction <add>, %36, %cst_13 [1] : vector<64x64xf32> to vector<64xf32>
    %38 = vector.shape_cast %37 : vector<64xf32> to vector<64x1xf32>
    %39 = vector.broadcast %38 : vector<64x1xf32> to vector<64x64xf32>
    %40 = arith.divf %36, %39 : vector<64x64xf32>
    %c0_14 = arith.constant 0 : index
    %c0_15 = arith.constant 0 : index
    %41 = vector.load %arg13[%c0_14, %c0_15] : memref<64x64xf32, #tpu.memory_space<vmem>>, vector<64x64xf32>
    tpu.vector_store %arg13[%c0_14, %c0_15], %40 {strides = array<i32>} : memref<64x64xf32, #tpu.memory_space<vmem>>, vector<64x64xf32>,
    %cst_16 = arith.constant dense<0.000000e+00> : vector<64x8xf32>
    %42 = tpu.matmul %40, %26, %cst_16 {dimension_numbers = #tpu.dot_dimension_numbers<[1], [0], [0], [1], [0, 0, 1, 1], [], []>} : vector<64x64xf32>, vector<64x8xf32>, vector<64x8xf32> -> vector<64x8xf32>
    %c0_17 = arith.constant 0 : index
    %c0_18 = arith.constant 0 : index
    %c0_19 = arith.constant 0 : index
    %43 = vector.load %arg6[%c0_17, %c0_18, %c0_19] : memref<1x1x32xf32, #tpu.memory_space<vmem>>, vector<1x1x32xf32>
    %44 = vector.shape_cast %43 : vector<1x1x32xf32> to vector<1x32xf32>
    %45 = vector.extract_strided_slice %42 {offsets = [0, 0], sizes = [16, 8], strides = [1, 1]} : vector<64x8xf32> to vector<16x8xf32>
    %46 = arith.truncf %45 : vector<16x8xf32> to vector<16x8xbf16>
    %c0_20 = arith.constant 0 : index
    %c0_21 = arith.constant 0 : index
    %c0_22 = arith.constant 0 : index
    %c0_23 = arith.constant 0 : index
    %47 = vector.load %arg5[%c0_20, %c0_21, %c0_22, %c0_23] : memref<1x4x8x32xbf16, #tpu.memory_space<vmem>>, vector<1x1x8x32xbf16>
    %48 = vector.shape_cast %47 : vector<1x1x8x32xbf16> to vector<8x32xbf16>
    %cst_24 = arith.constant dense<0.000000e+00> : vector<16x32xf32>
    %49 = tpu.matmul %46, %48, %cst_24 {dimension_numbers = #tpu.dot_dimension_numbers<[1], [0], [0], [1], [0, 0, 1, 1], [], []>} : vector<16x8xbf16>, vector<8x32xbf16>, vector<16x32xf32> -> vector<16x32xf32>
    %50 = vector.broadcast %44 : vector<1x32xf32> to vector<16x32xf32>
    %51 = arith.addf %50, %49 : vector<16x32xf32>
    %52 = vector.extract_strided_slice %42 {offsets = [16, 0], sizes = [16, 8], strides = [1, 1]} : vector<64x8xf32> to vector<16x8xf32>
    %53 = arith.truncf %52 : vector<16x8xf32> to vector<16x8xbf16>
    %c0_25 = arith.constant 0 : index
    %c1 = arith.constant 1 : index
    %c0_26 = arith.constant 0 : index
    %c0_27 = arith.constant 0 : index
    %54 = vector.load %arg5[%c0_25, %c1, %c0_26, %c0_27] : memref<1x4x8x32xbf16, #tpu.memory_space<vmem>>, vector<1x1x8x32xbf16>
    %55 = vector.shape_cast %54 : vector<1x1x8x32xbf16> to vector<8x32xbf16>
    %cst_28 = arith.constant dense<0.000000e+00> : vector<16x32xf32>
    %56 = tpu.matmul %53, %55, %cst_28 {dimension_numbers = #tpu.dot_dimension_numbers<[1], [0], [0], [1], [0, 0, 1, 1], [], []>} : vector<16x8xbf16>, vector<8x32xbf16>, vector<16x32xf32> -> vector<16x32xf32>
    %57 = arith.addf %51, %56 : vector<16x32xf32>
    %58 = vector.extract_strided_slice %42 {offsets = [32, 0], sizes = [16, 8], strides = [1, 1]} : vector<64x8xf32> to vector<16x8xf32>
    %59 = arith.truncf %58 : vector<16x8xf32> to vector<16x8xbf16>
    %c0_29 = arith.constant 0 : index
    %c2 = arith.constant 2 : index
    %c0_30 = arith.constant 0 : index
    %c0_31 = arith.constant 0 : index
    %60 = vector.load %arg5[%c0_29, %c2, %c0_30, %c0_31] : memref<1x4x8x32xbf16, #tpu.memory_space<vmem>>, vector<1x1x8x32xbf16>
    %61 = vector.shape_cast %60 : vector<1x1x8x32xbf16> to vector<8x32xbf16>
    %cst_32 = arith.constant dense<0.000000e+00> : vector<16x32xf32>
    %62 = tpu.matmul %59, %61, %cst_32 {dimension_numbers = #tpu.dot_dimension_numbers<[1], [0], [0], [1], [0, 0, 1, 1], [], []>} : vector<16x8xbf16>, vector<8x32xbf16>, vector<16x32xf32> -> vector<16x32xf32>
    %63 = arith.addf %57, %62 : vector<16x32xf32>
    %64 = vector.extract_strided_slice %42 {offsets = [48, 0], sizes = [16, 8], strides = [1, 1]} : vector<64x8xf32> to vector<16x8xf32>
    %65 = arith.truncf %64 : vector<16x8xf32> to vector<16x8xbf16>
    %c0_33 = arith.constant 0 : index
    %c3 = arith.constant 3 : index
    %c0_34 = arith.constant 0 : index
    %c0_35 = arith.constant 0 : index
    %66 = vector.load %arg5[%c0_33, %c3, %c0_34, %c0_35] : memref<1x4x8x32xbf16, #tpu.memory_space<vmem>>, vector<1x1x8x32xbf16>
    %67 = vector.shape_cast %66 : vector<1x1x8x32xbf16> to vector<8x32xbf16>
    %cst_36 = arith.constant dense<0.000000e+00> : vector<16x32xf32>
    %68 = tpu.matmul %65, %67, %cst_36 {dimension_numbers = #tpu.dot_dimension_numbers<[1], [0], [0], [1], [0, 0, 1, 1], [], []>} : vector<16x8xbf16>, vector<8x32xbf16>, vector<16x32xf32> -> vector<16x32xf32>
    %69 = arith.addf %63, %68 : vector<16x32xf32>
    %c0_37 = arith.constant 0 : index
    %c0_38 = arith.constant 0 : index
    %c0_39 = arith.constant 0 : index
    %70 = vector.load %arg7[%c0_37, %c0_38, %c0_39] : memref<1x32x128xbf16, #tpu.memory_space<vmem>>, vector<1x32x128xbf16>
    %71 = vector.shape_cast %70 : vector<1x32x128xbf16> to vector<32x128xbf16>
    %cst_40 = arith.constant dense<0.000000e+00> : vector<16x128xf32>
    %72 = tpu.matmul %4, %71, %cst_40 {dimension_numbers = #tpu.dot_dimension_numbers<[1], [0], [0], [1], [0, 0, 1, 1], [], []>} : vector<16x32xbf16>, vector<32x128xbf16>, vector<16x128xf32> -> vector<16x128xf32>
    %73 = arith.truncf %69 : vector<16x32xf32> to vector<16x32xbf16>
    %c0_41 = arith.constant 0 : index
    %c0_42 = arith.constant 0 : index
    %c0_43 = arith.constant 0 : index
    %74 = vector.load %arg8[%c0_41, %c0_42, %c0_43] : memref<1x32x128xbf16, #tpu.memory_space<vmem>>, vector<1x32x128xbf16>
    %75 = vector.shape_cast %74 : vector<1x32x128xbf16> to vector<32x128xbf16>
    %cst_44 = arith.constant dense<0.000000e+00> : vector<16x128xf32>
    %76 = tpu.matmul %73, %75, %cst_44 {dimension_numbers = #tpu.dot_dimension_numbers<[1], [0], [0], [1], [0, 0, 1, 1], [], []>} : vector<16x32xbf16>, vector<32x128xbf16>, vector<16x128xf32> -> vector<16x128xf32>
    %77 = arith.addf %72, %76 : vector<16x128xf32>
    %c0_45 = arith.constant 0 : index
    %c0_46 = arith.constant 0 : index
    %c0_47 = arith.constant 0 : index
    %78 = vector.load %arg10[%c0_45, %c0_46, %c0_47] : memref<1x1x128xf32, #tpu.memory_space<vmem>>, vector<1x1x128xf32>
    %79 = vector.shape_cast %78 : vector<1x1x128xf32> to vector<1x128xf32>
    %80 = vector.broadcast %79 : vector<1x128xf32> to vector<16x128xf32>
    %81 = arith.addf %77, %80 : vector<16x128xf32>
    %c0_48 = arith.constant 0 : index
    %c0_49 = arith.constant 0 : index
    %c0_50 = arith.constant 0 : index
    %82 = vector.load %arg9[%c0_48, %c0_49, %c0_50] : memref<1x32x128xbf16, #tpu.memory_space<vmem>>, vector<1x32x128xbf16>
    %83 = vector.shape_cast %82 : vector<1x32x128xbf16> to vector<32x128xbf16>
    %cst_51 = arith.constant 0.000000e+00 : f32
    %84 = vector.broadcast %cst_51 : f32 to vector<2x32xf32>
    %cst_52 = arith.constant 0.000000e+00 : f32
    %85 = vector.broadcast %cst_52 : f32 to vector<2x32xf32>
    %86 = vector.extract_strided_slice %81 {offsets = [0, 0], sizes = [2, 128], strides = [1, 1]} : vector<16x128xf32> to vector<2x128xf32>
    %87 = arith.truncf %84 : vector<2x32xf32> to vector<2x32xbf16>
    %cst_53 = arith.constant dense<0.000000e+00> : vector<2x128xf32>
    %88 = tpu.matmul %87, %83, %cst_53 {dimension_numbers = #tpu.dot_dimension_numbers<[1], [0], [0], [1], [0, 0, 1, 1], [], []>} : vector<2x32xbf16>, vector<32x128xbf16>, vector<2x128xf32> -> vector<2x128xf32>
    %89 = arith.addf %86, %88 : vector<2x128xf32>
    %90 = vector.extract_strided_slice %89 {offsets = [0, 0], sizes = [2, 32], strides = [1, 1]} : vector<2x128xf32> to vector<2x32xf32>
    %91 = arith.negf %90 : vector<2x32xf32>
    %92 = math.exp %91 : vector<2x32xf32>
    %cst_54 = arith.constant 1.000000e+00 : f32
    %93 = vector.broadcast %cst_54 : f32 to vector<2x32xf32>
    %94 = arith.addf %93, %92 : vector<2x32xf32>
    %95 = arith.divf %93, %94 : vector<2x32xf32>
    %96 = vector.extract_strided_slice %89 {offsets = [0, 32], sizes = [2, 32], strides = [1, 1]} : vector<2x128xf32> to vector<2x32xf32>
    %97 = arith.negf %96 : vector<2x32xf32>
    %98 = math.exp %97 : vector<2x32xf32>
    %cst_55 = arith.constant 1.000000e+00 : f32
    %99 = vector.broadcast %cst_55 : f32 to vector<2x32xf32>
    %100 = arith.addf %99, %98 : vector<2x32xf32>
    %101 = arith.divf %99, %100 : vector<2x32xf32>
    %102 = vector.extract_strided_slice %89 {offsets = [0, 64], sizes = [2, 32], strides = [1, 1]} : vector<2x128xf32> to vector<2x32xf32>
    %103 = math.tanh %102 : vector<2x32xf32>
    %104 = vector.extract_strided_slice %89 {offsets = [0, 96], sizes = [2, 32], strides = [1, 1]} : vector<2x128xf32> to vector<2x32xf32>
    %105 = arith.negf %104 : vector<2x32xf32>
    %106 = math.exp %105 : vector<2x32xf32>
    %cst_56 = arith.constant 1.000000e+00 : f32
    %107 = vector.broadcast %cst_56 : f32 to vector<2x32xf32>
    %108 = arith.addf %107, %106 : vector<2x32xf32>
    %109 = arith.divf %107, %108 : vector<2x32xf32>
    %110 = arith.mulf %101, %85 : vector<2x32xf32>
    %111 = arith.mulf %95, %103 : vector<2x32xf32>
    %112 = arith.addf %110, %111 : vector<2x32xf32>
    %113 = math.tanh %112 : vector<2x32xf32>
    %114 = arith.mulf %109, %113 : vector<2x32xf32>
    %c0_57 = arith.constant 0 : index
    %c0_58 = arith.constant 0 : index
    %115 = vector.load %arg14[%c0_57, %c0_58] : memref<16x32xf32, #tpu.memory_space<vmem>>, vector<2x32xf32>
    tpu.vector_store %arg14[%c0_57, %c0_58], %114 {strides = array<i32>} : memref<16x32xf32, #tpu.memory_space<vmem>>, vector<2x32xf32>,
    %116 = vector.extract_strided_slice %81 {offsets = [2, 0], sizes = [2, 128], strides = [1, 1]} : vector<16x128xf32> to vector<2x128xf32>
    %117 = arith.truncf %114 : vector<2x32xf32> to vector<2x32xbf16>
    %cst_59 = arith.constant dense<0.000000e+00> : vector<2x128xf32>
    %118 = tpu.matmul %117, %83, %cst_59 {dimension_numbers = #tpu.dot_dimension_numbers<[1], [0], [0], [1], [0, 0, 1, 1], [], []>} : vector<2x32xbf16>, vector<32x128xbf16>, vector<2x128xf32> -> vector<2x128xf32>
    %119 = arith.addf %116, %118 : vector<2x128xf32>
    %120 = vector.extract_strided_slice %119 {offsets = [0, 0], sizes = [2, 32], strides = [1, 1]} : vector<2x128xf32> to vector<2x32xf32>
    %121 = arith.negf %120 : vector<2x32xf32>
    %122 = math.exp %121 : vector<2x32xf32>
    %cst_60 = arith.constant 1.000000e+00 : f32
    %123 = vector.broadcast %cst_60 : f32 to vector<2x32xf32>
    %124 = arith.addf %123, %122 : vector<2x32xf32>
    %125 = arith.divf %123, %124 : vector<2x32xf32>
    %126 = vector.extract_strided_slice %119 {offsets = [0, 32], sizes = [2, 32], strides = [1, 1]} : vector<2x128xf32> to vector<2x32xf32>
    %127 = arith.negf %126 : vector<2x32xf32>
    %128 = math.exp %127 : vector<2x32xf32>
    %cst_61 = arith.constant 1.000000e+00 : f32
    %129 = vector.broadcast %cst_61 : f32 to vector<2x32xf32>
    %130 = arith.addf %129, %128 : vector<2x32xf32>
    %131 = arith.divf %129, %130 : vector<2x32xf32>
    %132 = vector.extract_strided_slice %119 {offsets = [0, 64], sizes = [2, 32], strides = [1, 1]} : vector<2x128xf32> to vector<2x32xf32>
    %133 = math.tanh %132 : vector<2x32xf32>
    %134 = vector.extract_strided_slice %119 {offsets = [0, 96], sizes = [2, 32], strides = [1, 1]} : vector<2x128xf32> to vector<2x32xf32>
    %135 = arith.negf %134 : vector<2x32xf32>
    %136 = math.exp %135 : vector<2x32xf32>
    %cst_62 = arith.constant 1.000000e+00 : f32
    %137 = vector.broadcast %cst_62 : f32 to vector<2x32xf32>
    %138 = arith.addf %137, %136 : vector<2x32xf32>
    %139 = arith.divf %137, %138 : vector<2x32xf32>
    %140 = arith.mulf %131, %112 : vector<2x32xf32>
    %141 = arith.mulf %125, %133 : vector<2x32xf32>
    %142 = arith.addf %140, %141 : vector<2x32xf32>
    %143 = math.tanh %142 : vector<2x32xf32>
    %144 = arith.mulf %139, %143 : vector<2x32xf32>
    %c2_63 = arith.constant 2 : index
    %c0_64 = arith.constant 0 : index
    %145 = vector.load %arg14[%c2_63, %c0_64] : memref<16x32xf32, #tpu.memory_space<vmem>>, vector<2x32xf32>
    tpu.vector_store %arg14[%c2_63, %c0_64], %144 {strides = array<i32>} : memref<16x32xf32, #tpu.memory_space<vmem>>, vector<2x32xf32>,
    %146 = vector.extract_strided_slice %81 {offsets = [4, 0], sizes = [2, 128], strides = [1, 1]} : vector<16x128xf32> to vector<2x128xf32>
    %147 = arith.truncf %144 : vector<2x32xf32> to vector<2x32xbf16>
    %cst_65 = arith.constant dense<0.000000e+00> : vector<2x128xf32>
    %148 = tpu.matmul %147, %83, %cst_65 {dimension_numbers = #tpu.dot_dimension_numbers<[1], [0], [0], [1], [0, 0, 1, 1], [], []>} : vector<2x32xbf16>, vector<32x128xbf16>, vector<2x128xf32> -> vector<2x128xf32>
    %149 = arith.addf %146, %148 : vector<2x128xf32>
    %150 = vector.extract_strided_slice %149 {offsets = [0, 0], sizes = [2, 32], strides = [1, 1]} : vector<2x128xf32> to vector<2x32xf32>
    %151 = arith.negf %150 : vector<2x32xf32>
    %152 = math.exp %151 : vector<2x32xf32>
    %cst_66 = arith.constant 1.000000e+00 : f32
    %153 = vector.broadcast %cst_66 : f32 to vector<2x32xf32>
    %154 = arith.addf %153, %152 : vector<2x32xf32>
    %155 = arith.divf %153, %154 : vector<2x32xf32>
    %156 = vector.extract_strided_slice %149 {offsets = [0, 32], sizes = [2, 32], strides = [1, 1]} : vector<2x128xf32> to vector<2x32xf32>
    %157 = arith.negf %156 : vector<2x32xf32>
    %158 = math.exp %157 : vector<2x32xf32>
    %cst_67 = arith.constant 1.000000e+00 : f32
    %159 = vector.broadcast %cst_67 : f32 to vector<2x32xf32>
    %160 = arith.addf %159, %158 : vector<2x32xf32>
    %161 = arith.divf %159, %160 : vector<2x32xf32>
    %162 = vector.extract_strided_slice %149 {offsets = [0, 64], sizes = [2, 32], strides = [1, 1]} : vector<2x128xf32> to vector<2x32xf32>
    %163 = math.tanh %162 : vector<2x32xf32>
    %164 = vector.extract_strided_slice %149 {offsets = [0, 96], sizes = [2, 32], strides = [1, 1]} : vector<2x128xf32> to vector<2x32xf32>
    %165 = arith.negf %164 : vector<2x32xf32>
    %166 = math.exp %165 : vector<2x32xf32>
    %cst_68 = arith.constant 1.000000e+00 : f32
    %167 = vector.broadcast %cst_68 : f32 to vector<2x32xf32>
    %168 = arith.addf %167, %166 : vector<2x32xf32>
    %169 = arith.divf %167, %168 : vector<2x32xf32>
    %170 = arith.mulf %161, %142 : vector<2x32xf32>
    %171 = arith.mulf %155, %163 : vector<2x32xf32>
    %172 = arith.addf %170, %171 : vector<2x32xf32>
    %173 = math.tanh %172 : vector<2x32xf32>
    %174 = arith.mulf %169, %173 : vector<2x32xf32>
    %c4 = arith.constant 4 : index
    %c0_69 = arith.constant 0 : index
    %175 = vector.load %arg14[%c4, %c0_69] : memref<16x32xf32, #tpu.memory_space<vmem>>, vector<2x32xf32>
    tpu.vector_store %arg14[%c4, %c0_69], %174 {strides = array<i32>} : memref<16x32xf32, #tpu.memory_space<vmem>>, vector<2x32xf32>,
    %176 = vector.extract_strided_slice %81 {offsets = [6, 0], sizes = [2, 128], strides = [1, 1]} : vector<16x128xf32> to vector<2x128xf32>
    %177 = arith.truncf %174 : vector<2x32xf32> to vector<2x32xbf16>
    %cst_70 = arith.constant dense<0.000000e+00> : vector<2x128xf32>
    %178 = tpu.matmul %177, %83, %cst_70 {dimension_numbers = #tpu.dot_dimension_numbers<[1], [0], [0], [1], [0, 0, 1, 1], [], []>} : vector<2x32xbf16>, vector<32x128xbf16>, vector<2x128xf32> -> vector<2x128xf32>
    %179 = arith.addf %176, %178 : vector<2x128xf32>
    %180 = vector.extract_strided_slice %179 {offsets = [0, 0], sizes = [2, 32], strides = [1, 1]} : vector<2x128xf32> to vector<2x32xf32>
    %181 = arith.negf %180 : vector<2x32xf32>
    %182 = math.exp %181 : vector<2x32xf32>
    %cst_71 = arith.constant 1.000000e+00 : f32
    %183 = vector.broadcast %cst_71 : f32 to vector<2x32xf32>
    %184 = arith.addf %183, %182 : vector<2x32xf32>
    %185 = arith.divf %183, %184 : vector<2x32xf32>
    %186 = vector.extract_strided_slice %179 {offsets = [0, 32], sizes = [2, 32], strides = [1, 1]} : vector<2x128xf32> to vector<2x32xf32>
    %187 = arith.negf %186 : vector<2x32xf32>
    %188 = math.exp %187 : vector<2x32xf32>
    %cst_72 = arith.constant 1.000000e+00 : f32
    %189 = vector.broadcast %cst_72 : f32 to vector<2x32xf32>
    %190 = arith.addf %189, %188 : vector<2x32xf32>
    %191 = arith.divf %189, %190 : vector<2x32xf32>
    %192 = vector.extract_strided_slice %179 {offsets = [0, 64], sizes = [2, 32], strides = [1, 1]} : vector<2x128xf32> to vector<2x32xf32>
    %193 = math.tanh %192 : vector<2x32xf32>
    %194 = vector.extract_strided_slice %179 {offsets = [0, 96], sizes = [2, 32], strides = [1, 1]} : vector<2x128xf32> to vector<2x32xf32>
    %195 = arith.negf %194 : vector<2x32xf32>
    %196 = math.exp %195 : vector<2x32xf32>
    %cst_73 = arith.constant 1.000000e+00 : f32
    %197 = vector.broadcast %cst_73 : f32 to vector<2x32xf32>
    %198 = arith.addf %197, %196 : vector<2x32xf32>
    %199 = arith.divf %197, %198 : vector<2x32xf32>
    %200 = arith.mulf %191, %172 : vector<2x32xf32>
    %201 = arith.mulf %185, %193 : vector<2x32xf32>
    %202 = arith.addf %200, %201 : vector<2x32xf32>
    %203 = math.tanh %202 : vector<2x32xf32>
    %204 = arith.mulf %199, %203 : vector<2x32xf32>
    %c6 = arith.constant 6 : index
    %c0_74 = arith.constant 0 : index
    %205 = vector.load %arg14[%c6, %c0_74] : memref<16x32xf32, #tpu.memory_space<vmem>>, vector<2x32xf32>
    tpu.vector_store %arg14[%c6, %c0_74], %204 {strides = array<i32>} : memref<16x32xf32, #tpu.memory_space<vmem>>, vector<2x32xf32>,
    %206 = vector.extract_strided_slice %81 {offsets = [8, 0], sizes = [2, 128], strides = [1, 1]} : vector<16x128xf32> to vector<2x128xf32>
    %207 = arith.truncf %204 : vector<2x32xf32> to vector<2x32xbf16>
    %cst_75 = arith.constant dense<0.000000e+00> : vector<2x128xf32>
    %208 = tpu.matmul %207, %83, %cst_75 {dimension_numbers = #tpu.dot_dimension_numbers<[1], [0], [0], [1], [0, 0, 1, 1], [], []>} : vector<2x32xbf16>, vector<32x128xbf16>, vector<2x128xf32> -> vector<2x128xf32>
    %209 = arith.addf %206, %208 : vector<2x128xf32>
    %210 = vector.extract_strided_slice %209 {offsets = [0, 0], sizes = [2, 32], strides = [1, 1]} : vector<2x128xf32> to vector<2x32xf32>
    %211 = arith.negf %210 : vector<2x32xf32>
    %212 = math.exp %211 : vector<2x32xf32>
    %cst_76 = arith.constant 1.000000e+00 : f32
    %213 = vector.broadcast %cst_76 : f32 to vector<2x32xf32>
    %214 = arith.addf %213, %212 : vector<2x32xf32>
    %215 = arith.divf %213, %214 : vector<2x32xf32>
    %216 = vector.extract_strided_slice %209 {offsets = [0, 32], sizes = [2, 32], strides = [1, 1]} : vector<2x128xf32> to vector<2x32xf32>
    %217 = arith.negf %216 : vector<2x32xf32>
    %218 = math.exp %217 : vector<2x32xf32>
    %cst_77 = arith.constant 1.000000e+00 : f32
    %219 = vector.broadcast %cst_77 : f32 to vector<2x32xf32>
    %220 = arith.addf %219, %218 : vector<2x32xf32>
    %221 = arith.divf %219, %220 : vector<2x32xf32>
    %222 = vector.extract_strided_slice %209 {offsets = [0, 64], sizes = [2, 32], strides = [1, 1]} : vector<2x128xf32> to vector<2x32xf32>
    %223 = math.tanh %222 : vector<2x32xf32>
    %224 = vector.extract_strided_slice %209 {offsets = [0, 96], sizes = [2, 32], strides = [1, 1]} : vector<2x128xf32> to vector<2x32xf32>
    %225 = arith.negf %224 : vector<2x32xf32>
    %226 = math.exp %225 : vector<2x32xf32>
    %cst_78 = arith.constant 1.000000e+00 : f32
    %227 = vector.broadcast %cst_78 : f32 to vector<2x32xf32>
    %228 = arith.addf %227, %226 : vector<2x32xf32>
    %229 = arith.divf %227, %228 : vector<2x32xf32>
    %230 = arith.mulf %221, %202 : vector<2x32xf32>
    %231 = arith.mulf %215, %223 : vector<2x32xf32>
    %232 = arith.addf %230, %231 : vector<2x32xf32>
    %233 = math.tanh %232 : vector<2x32xf32>
    %234 = arith.mulf %229, %233 : vector<2x32xf32>
    %c8 = arith.constant 8 : index
    %c0_79 = arith.constant 0 : index
    %235 = vector.load %arg14[%c8, %c0_79] : memref<16x32xf32, #tpu.memory_space<vmem>>, vector<2x32xf32>
    tpu.vector_store %arg14[%c8, %c0_79], %234 {strides = array<i32>} : memref<16x32xf32, #tpu.memory_space<vmem>>, vector<2x32xf32>,
    %236 = vector.extract_strided_slice %81 {offsets = [10, 0], sizes = [2, 128], strides = [1, 1]} : vector<16x128xf32> to vector<2x128xf32>
    %237 = arith.truncf %234 : vector<2x32xf32> to vector<2x32xbf16>
    %cst_80 = arith.constant dense<0.000000e+00> : vector<2x128xf32>
    %238 = tpu.matmul %237, %83, %cst_80 {dimension_numbers = #tpu.dot_dimension_numbers<[1], [0], [0], [1], [0, 0, 1, 1], [], []>} : vector<2x32xbf16>, vector<32x128xbf16>, vector<2x128xf32> -> vector<2x128xf32>
    %239 = arith.addf %236, %238 : vector<2x128xf32>
    %240 = vector.extract_strided_slice %239 {offsets = [0, 0], sizes = [2, 32], strides = [1, 1]} : vector<2x128xf32> to vector<2x32xf32>
    %241 = arith.negf %240 : vector<2x32xf32>
    %242 = math.exp %241 : vector<2x32xf32>
    %cst_81 = arith.constant 1.000000e+00 : f32
    %243 = vector.broadcast %cst_81 : f32 to vector<2x32xf32>
    %244 = arith.addf %243, %242 : vector<2x32xf32>
    %245 = arith.divf %243, %244 : vector<2x32xf32>
    %246 = vector.extract_strided_slice %239 {offsets = [0, 32], sizes = [2, 32], strides = [1, 1]} : vector<2x128xf32> to vector<2x32xf32>
    %247 = arith.negf %246 : vector<2x32xf32>
    %248 = math.exp %247 : vector<2x32xf32>
    %cst_82 = arith.constant 1.000000e+00 : f32
    %249 = vector.broadcast %cst_82 : f32 to vector<2x32xf32>
    %250 = arith.addf %249, %248 : vector<2x32xf32>
    %251 = arith.divf %249, %250 : vector<2x32xf32>
    %252 = vector.extract_strided_slice %239 {offsets = [0, 64], sizes = [2, 32], strides = [1, 1]} : vector<2x128xf32> to vector<2x32xf32>
    %253 = math.tanh %252 : vector<2x32xf32>
    %254 = vector.extract_strided_slice %239 {offsets = [0, 96], sizes = [2, 32], strides = [1, 1]} : vector<2x128xf32> to vector<2x32xf32>
    %255 = arith.negf %254 : vector<2x32xf32>
    %256 = math.exp %255 : vector<2x32xf32>
    %cst_83 = arith.constant 1.000000e+00 : f32
    %257 = vector.broadcast %cst_83 : f32 to vector<2x32xf32>
    %258 = arith.addf %257, %256 : vector<2x32xf32>
    %259 = arith.divf %257, %258 : vector<2x32xf32>
    %260 = arith.mulf %251, %232 : vector<2x32xf32>
    %261 = arith.mulf %245, %253 : vector<2x32xf32>
    %262 = arith.addf %260, %261 : vector<2x32xf32>
    %263 = math.tanh %262 : vector<2x32xf32>
    %264 = arith.mulf %259, %263 : vector<2x32xf32>
    %c10 = arith.constant 10 : index
    %c0_84 = arith.constant 0 : index
    %265 = vector.load %arg14[%c10, %c0_84] : memref<16x32xf32, #tpu.memory_space<vmem>>, vector<2x32xf32>
    tpu.vector_store %arg14[%c10, %c0_84], %264 {strides = array<i32>} : memref<16x32xf32, #tpu.memory_space<vmem>>, vector<2x32xf32>,
    %266 = vector.extract_strided_slice %81 {offsets = [12, 0], sizes = [2, 128], strides = [1, 1]} : vector<16x128xf32> to vector<2x128xf32>
    %267 = arith.truncf %264 : vector<2x32xf32> to vector<2x32xbf16>
    %cst_85 = arith.constant dense<0.000000e+00> : vector<2x128xf32>
    %268 = tpu.matmul %267, %83, %cst_85 {dimension_numbers = #tpu.dot_dimension_numbers<[1], [0], [0], [1], [0, 0, 1, 1], [], []>} : vector<2x32xbf16>, vector<32x128xbf16>, vector<2x128xf32> -> vector<2x128xf32>
    %269 = arith.addf %266, %268 : vector<2x128xf32>
    %270 = vector.extract_strided_slice %269 {offsets = [0, 0], sizes = [2, 32], strides = [1, 1]} : vector<2x128xf32> to vector<2x32xf32>
    %271 = arith.negf %270 : vector<2x32xf32>
    %272 = math.exp %271 : vector<2x32xf32>
    %cst_86 = arith.constant 1.000000e+00 : f32
    %273 = vector.broadcast %cst_86 : f32 to vector<2x32xf32>
    %274 = arith.addf %273, %272 : vector<2x32xf32>
    %275 = arith.divf %273, %274 : vector<2x32xf32>
    %276 = vector.extract_strided_slice %269 {offsets = [0, 32], sizes = [2, 32], strides = [1, 1]} : vector<2x128xf32> to vector<2x32xf32>
    %277 = arith.negf %276 : vector<2x32xf32>
    %278 = math.exp %277 : vector<2x32xf32>
    %cst_87 = arith.constant 1.000000e+00 : f32
    %279 = vector.broadcast %cst_87 : f32 to vector<2x32xf32>
    %280 = arith.addf %279, %278 : vector<2x32xf32>
    %281 = arith.divf %279, %280 : vector<2x32xf32>
    %282 = vector.extract_strided_slice %269 {offsets = [0, 64], sizes = [2, 32], strides = [1, 1]} : vector<2x128xf32> to vector<2x32xf32>
    %283 = math.tanh %282 : vector<2x32xf32>
    %284 = vector.extract_strided_slice %269 {offsets = [0, 96], sizes = [2, 32], strides = [1, 1]} : vector<2x128xf32> to vector<2x32xf32>
    %285 = arith.negf %284 : vector<2x32xf32>
    %286 = math.exp %285 : vector<2x32xf32>
    %cst_88 = arith.constant 1.000000e+00 : f32
    %287 = vector.broadcast %cst_88 : f32 to vector<2x32xf32>
    %288 = arith.addf %287, %286 : vector<2x32xf32>
    %289 = arith.divf %287, %288 : vector<2x32xf32>
    %290 = arith.mulf %281, %262 : vector<2x32xf32>
    %291 = arith.mulf %275, %283 : vector<2x32xf32>
    %292 = arith.addf %290, %291 : vector<2x32xf32>
    %293 = math.tanh %292 : vector<2x32xf32>
    %294 = arith.mulf %289, %293 : vector<2x32xf32>
    %c12 = arith.constant 12 : index
    %c0_89 = arith.constant 0 : index
    %295 = vector.load %arg14[%c12, %c0_89] : memref<16x32xf32, #tpu.memory_space<vmem>>, vector<2x32xf32>
    tpu.vector_store %arg14[%c12, %c0_89], %294 {strides = array<i32>} : memref<16x32xf32, #tpu.memory_space<vmem>>, vector<2x32xf32>,
    %296 = vector.extract_strided_slice %81 {offsets = [14, 0], sizes = [2, 128], strides = [1, 1]} : vector<16x128xf32> to vector<2x128xf32>
    %297 = arith.truncf %294 : vector<2x32xf32> to vector<2x32xbf16>
    %cst_90 = arith.constant dense<0.000000e+00> : vector<2x128xf32>
    %298 = tpu.matmul %297, %83, %cst_90 {dimension_numbers = #tpu.dot_dimension_numbers<[1], [0], [0], [1], [0, 0, 1, 1], [], []>} : vector<2x32xbf16>, vector<32x128xbf16>, vector<2x128xf32> -> vector<2x128xf32>
    %299 = arith.addf %296, %298 : vector<2x128xf32>
    %300 = vector.extract_strided_slice %299 {offsets = [0, 0], sizes = [2, 32], strides = [1, 1]} : vector<2x128xf32> to vector<2x32xf32>
    %301 = arith.negf %300 : vector<2x32xf32>
    %302 = math.exp %301 : vector<2x32xf32>
    %cst_91 = arith.constant 1.000000e+00 : f32
    %303 = vector.broadcast %cst_91 : f32 to vector<2x32xf32>
    %304 = arith.addf %303, %302 : vector<2x32xf32>
    %305 = arith.divf %303, %304 : vector<2x32xf32>
    %306 = vector.extract_strided_slice %299 {offsets = [0, 32], sizes = [2, 32], strides = [1, 1]} : vector<2x128xf32> to vector<2x32xf32>
    %307 = arith.negf %306 : vector<2x32xf32>
    %308 = math.exp %307 : vector<2x32xf32>
    %cst_92 = arith.constant 1.000000e+00 : f32
    %309 = vector.broadcast %cst_92 : f32 to vector<2x32xf32>
    %310 = arith.addf %309, %308 : vector<2x32xf32>
    %311 = arith.divf %309, %310 : vector<2x32xf32>
    %312 = vector.extract_strided_slice %299 {offsets = [0, 64], sizes = [2, 32], strides = [1, 1]} : vector<2x128xf32> to vector<2x32xf32>
    %313 = math.tanh %312 : vector<2x32xf32>
    %314 = vector.extract_strided_slice %299 {offsets = [0, 96], sizes = [2, 32], strides = [1, 1]} : vector<2x128xf32> to vector<2x32xf32>
    %315 = arith.negf %314 : vector<2x32xf32>
    %316 = math.exp %315 : vector<2x32xf32>
    %cst_93 = arith.constant 1.000000e+00 : f32
    %317 = vector.broadcast %cst_93 : f32 to vector<2x32xf32>
    %318 = arith.addf %317, %316 : vector<2x32xf32>
    %319 = arith.divf %317, %318 : vector<2x32xf32>
    %320 = arith.mulf %311, %292 : vector<2x32xf32>
    %321 = arith.mulf %305, %313 : vector<2x32xf32>
    %322 = arith.addf %320, %321 : vector<2x32xf32>
    %323 = math.tanh %322 : vector<2x32xf32>
    %324 = arith.mulf %319, %323 : vector<2x32xf32>
    %c14 = arith.constant 14 : index
    %c0_94 = arith.constant 0 : index
    %325 = vector.load %arg14[%c14, %c0_94] : memref<16x32xf32, #tpu.memory_space<vmem>>, vector<2x32xf32>
    tpu.vector_store %arg14[%c14, %c0_94], %324 {strides = array<i32>} : memref<16x32xf32, #tpu.memory_space<vmem>>, vector<2x32xf32>,
    %c0_95 = arith.constant 0 : index
    %c0_96 = arith.constant 0 : index
    %326 = vector.load %arg12[%c0_95, %c0_96] : memref<2x32xf32, #tpu.memory_space<vmem>>, vector<2x32xf32>
    tpu.vector_store %arg12[%c0_95, %c0_96], %324 {strides = array<i32>} : memref<2x32xf32, #tpu.memory_space<vmem>>, vector<2x32xf32>,
    %c0_97 = arith.constant 0 : index
    %c0_98 = arith.constant 0 : index
    %327 = vector.load %arg14[%c0_97, %c0_98] : memref<16x32xf32, #tpu.memory_space<vmem>>, vector<16x32xf32>
    %c0_99 = arith.constant 0 : index
    %c0_100 = arith.constant 0 : index
    %328 = vector.load %arg11[%c0_99, %c0_100] : memref<16x32xf32, #tpu.memory_space<vmem>>, vector<16x32xf32>
    tpu.vector_store %arg11[%c0_99, %c0_100], %327 {strides = array<i32>} : memref<16x32xf32, #tpu.memory_space<vmem>>, vector<16x32xf32>,
    return
  }
  func.func @transform_0(%arg0: i32) -> (i32, i32) {
    %c0_i32 = arith.constant 0 : i32
    %c0_i32_0 = arith.constant 0 : i32
    %c0_i32_1 = arith.constant 0 : i32
    return %c0_i32, %c0_i32_0 : i32, i32
  }
  func.func @transform_1(%arg0: i32) -> (i32, i32) {
    %c0_i32 = arith.constant 0 : i32
    %c0_i32_0 = arith.constant 0 : i32
    %c0_i32_1 = arith.constant 0 : i32
    return %c0_i32, %c0_i32_0 : i32, i32
  }
  func.func @transform_2(%arg0: i32) -> (i32, i32, i32) {
    %c0_i32 = arith.constant 0 : i32
    %c0_i32_0 = arith.constant 0 : i32
    %c0_i32_1 = arith.constant 0 : i32
    return %arg0, %c0_i32, %c0_i32_0 : i32, i32, i32
  }
  func.func @transform_3(%arg0: i32) -> (i32, i32, i32) {
    %c0_i32 = arith.constant 0 : i32
    %c0_i32_0 = arith.constant 0 : i32
    %c0_i32_1 = arith.constant 0 : i32
    return %arg0, %c0_i32, %c0_i32_0 : i32, i32, i32
  }
  func.func @transform_4(%arg0: i32) -> (i32, i32, i32, i32) {
    %c0_i32 = arith.constant 0 : i32
    %c0_i32_0 = arith.constant 0 : i32
    %c0_i32_1 = arith.constant 0 : i32
    %c0_i32_2 = arith.constant 0 : i32
    return %arg0, %c0_i32, %c0_i32_0, %c0_i32_1 : i32, i32, i32, i32
  }
  func.func @transform_5(%arg0: i32) -> (i32, i32, i32) {
    %c0_i32 = arith.constant 0 : i32
    %c0_i32_0 = arith.constant 0 : i32
    %c0_i32_1 = arith.constant 0 : i32
    return %arg0, %c0_i32, %c0_i32_0 : i32, i32, i32
  }
  func.func @transform_6(%arg0: i32) -> (i32, i32, i32) {
    %c0_i32 = arith.constant 0 : i32
    %c0_i32_0 = arith.constant 0 : i32
    %c0_i32_1 = arith.constant 0 : i32
    return %arg0, %c0_i32, %c0_i32_0 : i32, i32, i32
  }
  func.func @transform_7(%arg0: i32) -> (i32, i32, i32) {
    %c0_i32 = arith.constant 0 : i32
    %c0_i32_0 = arith.constant 0 : i32
    %c0_i32_1 = arith.constant 0 : i32
    return %arg0, %c0_i32, %c0_i32_0 : i32, i32, i32
  }
  func.func @transform_8(%arg0: i32) -> (i32, i32, i32) {
    %c0_i32 = arith.constant 0 : i32
    %c0_i32_0 = arith.constant 0 : i32
    %c0_i32_1 = arith.constant 0 : i32
    return %arg0, %c0_i32, %c0_i32_0 : i32, i32, i32
  }
  func.func @transform_9(%arg0: i32) -> (i32, i32, i32) {
    %c0_i32 = arith.constant 0 : i32
    %c0_i32_0 = arith.constant 0 : i32
    %c0_i32_1 = arith.constant 0 : i32
    return %arg0, %c0_i32, %c0_i32_0 : i32, i32, i32
  }
  func.func @transform_10(%arg0: i32) -> (i32, i32) {
    %c0_i32 = arith.constant 0 : i32
    %c0_i32_0 = arith.constant 0 : i32
    %c0_i32_1 = arith.constant 0 : i32
    return %c0_i32, %c0_i32_0 : i32, i32
  }
  func.func @transform_11(%arg0: i32) -> (i32, i32) {
    %c0_i32 = arith.constant 0 : i32
    %c0_i32_0 = arith.constant 0 : i32
    %c0_i32_1 = arith.constant 0 : i32
    return %c0_i32, %c0_i32_0 : i32, i32
  }
  func.func @transform_12(%arg0: i32) -> (i32, i32) {
    %c0_i32 = arith.constant 0 : i32
    %c0_i32_0 = arith.constant 0 : i32
    %c0_i32_1 = arith.constant 0 : i32
    return %c0_i32, %c0_i32_0 : i32, i32
  }
}

</mosaic_0001>

<llo_original>
// kernel: encoder_forward.1
$region0: #{encoder_forward.1}
  #allocation0 [shape = 'u32[]', space=smem, size = 0x4, offset = 0x4, fixed_abs, tag = 'smem constant byte address 0x4 - core index']
  #allocation1 [shape = 'u32[144,128]{1,0:T(1,128)}', space=vmem, size = 0x12000, scoped, tag = 'internal scratch']
  #allocation2 [shape = 'f32[16,32]{1,0:T(8,128)}', space=vmem, size = 0x2000, scoped, tag = 'scratch operand']
  %s0 = inlined_call_operand.vmem [shape: f32[16,32], index: 0, kind: input, shape index: {}]
  %s1 = inlined_call_operand.vmem [shape: f32[64,64], index: 1, kind: input, shape index: {}]
  %s2 = inlined_call_operand.vmem [shape: bf16[2,32,96], index: 2, kind: input, shape index: {}]
  %s3 = inlined_call_operand.vmem [shape: f32[2,1,96], index: 3, kind: input, shape index: {}]
  %s4 = inlined_call_operand.vmem [shape: bf16[2,4,8,32], index: 4, kind: input, shape index: {}]
  %s5 = inlined_call_operand.vmem [shape: f32[2,1,32], index: 5, kind: input, shape index: {}]
  %s6 = inlined_call_operand.vmem [shape: bf16[2,32,128], index: 6, kind: input, shape index: {}]
  %s7 = inlined_call_operand.vmem [shape: bf16[2,32,128], index: 7, kind: input, shape index: {}]
  %s8 = inlined_call_operand.vmem [shape: bf16[2,32,128], index: 8, kind: input, shape index: {}]
  %s9 = inlined_call_operand.vmem [shape: f32[2,1,128], index: 9, kind: input, shape index: {}]
  %s10 = inlined_call_operand.vmem [shape: f32[16,32], index: 10, kind: output, shape index: {0}]
  %s11 = inlined_call_operand.hbm [shape: f32[2,32], index: 11, kind: output, shape index: {1}]
  %s12 = inlined_call_operand.vmem [shape: f32[64,64], index: 12, kind: output, shape index: {2}]
  %13 = xla_tuple %s10, %s11, %s12
  %s14 = sld [smem:[#allocation0]]
  $region93: #{encoder_forward.1} parent=0
    _
  %s16 = ssub.s32 1, %s14
  %s17 = scalar_select 0, %s16, %s14
  $region1: #{encoder_forward.1} parent=0
    #allocation3 [shape = 'u8[1024]{0}', space=vmem, size = 0x400, scoped, tag = 'output window, operand 1, single buffered']
    #allocation4 [shape = 's32[2]{0}', space=sflag, size = 0x8, scoped, tag = 'scoped memory for encoder_forward.1']
    %18 = vsyncpa [#allocation4], 0
    loop: start=0, step=1, limit=4
    $region2: #{encoder_forward.1} parent=1 // loop_pre_header
      _
    $region3: #{encoder_forward.1} parent=1 // loop_header
      %s20 = sphi 0, %s24
      %p21 = scmp.ge.s32.totalorder %s20, 4
      %s28 = sphi 0, %s28
      %s30 = sphi 0, %s28
      %s31 = sphi 0, %s30
      %s45 = sphi 0, %s31
      %s49 = sphi 0, %s49
      %s51 = sphi 0, %s49
      %s52 = sphi 0, %s51
      %s66 = sphi 0, %s52
      %s72 = sphi 0, %s74
      %s75 = sphi 0, %s72
      %s76 = sphi 0, %s75
      %s92 = sphi 0, %s76
      %s98 = sphi 0, %s100
      %s101 = sphi 0, %s98
      %s102 = sphi 0, %s101
      %s118 = sphi 0, %s102
      %s124 = sphi 0, %s126
      %s127 = sphi 0, %s124
      %s128 = sphi 0, %s127
      %s144 = sphi 0, %s128
      %s150 = sphi 0, %s152
      %s153 = sphi 0, %s150
      %s154 = sphi 0, %s153
      %s170 = sphi 0, %s154
      %s176 = sphi 0, %s178
      %s179 = sphi 0, %s176
      %s180 = sphi 0, %s179
      %s196 = sphi 0, %s180
      %s202 = sphi 0, %s204
      %s205 = sphi 0, %s202
      %s206 = sphi 0, %s205
      %s222 = sphi 0, %s206
      %s228 = sphi 0, %s230
      %s231 = sphi 0, %s228
      %s232 = sphi 0, %s231
      %s248 = sphi 0, %s232
      %s254 = sphi 0, %s256
      %s257 = sphi 0, %s254
      %s258 = sphi 0, %s257
      %s274 = sphi 0, %s258
      %s278 = sphi 0, %s278
      %s280 = sphi 0, %s278
      %s281 = sphi 0, %s280
      %s295 = sphi 0, %s281
      %s299 = sphi 0, %s299
      %s301 = sphi 0, %s299
      %s302 = sphi 0, %s301
      %s316 = sphi 0, %s302
      %s320 = sphi 0, %s320
      %s322 = sphi 0, %s320
      %s323 = sphi 0, %s322
      %s337 = sphi 0, %s323
    $region4: #{encoder_forward.1} parent=1 // loop_header_branch
      %23 = sbr.rel (%p21) target = $region8
    $region5: #{encoder_forward.1} parent=1 // loop_body
      %s25 = ssub.s32 %s20, 1
      %s26 = ssub.s32 %s20, 2
      %s27 = sadd.s32 %s20, 1
      %s29 = sadd.s32 %s28, 1
      %p32 = scmp.eq.s32.totalorder %s20, 1
      %p33 = scmp.ne.s32.totalorder %s28, %s30
      %p34 = scmp.eq.s32.totalorder %s20, 0
      %p35 = por %p33, %p34
      %p36 = scmp.ne.s32.totalorder %s28, %s30
      %p37 = scmp.eq.s32.totalorder %s25, 1
      %p38 = por %p36, %p37
      %p39 = scmp.ne.s32.totalorder %s30, %s31
      %p40 = scmp.eq.s32.totalorder %s25, 0
      %p41 = por %p39, %p40
      %p42 = scmp.ne.s32.totalorder %s30, %s31
      %p43 = scmp.eq.s32.totalorder %s26, 1
      %p44 = por %p42, %p43
      %p46 = scmp.ne.s32.totalorder %s31, %s45
      %p47 = scmp.eq.s32.totalorder %s26, 0
      %p48 = por %p46, %p47
      %s50 = sadd.s32 %s49, 1
      %p53 = scmp.eq.s32.totalorder %s20, 1
      %p54 = scmp.ne.s32.totalorder %s49, %s51
      %p55 = scmp.eq.s32.totalorder %s20, 0
      %p56 = por %p54, %p55
      %p57 = scmp.ne.s32.totalorder %s49, %s51
      %p58 = scmp.eq.s32.totalorder %s25, 1
      %p59 = por %p57, %p58
      %p60 = scmp.ne.s32.totalorder %s51, %s52
      %p61 = scmp.eq.s32.totalorder %s25, 0
      %p62 = por %p60, %p61
      %p63 = scmp.ne.s32.totalorder %s51, %s52
      %p64 = scmp.eq.s32.totalorder %s26, 1
      %p65 = por %p63, %p64
      %p67 = scmp.ne.s32.totalorder %s52, %s66
      %p68 = scmp.eq.s32.totalorder %s26, 0
      %p69 = por %p67, %p68
      %s70 = ssub.s32 %s20, %s27
      %p71 = scmp.eq.s32.totalorder %s70, 0
      %s73 = sadd.s32 %s72, 1
      %s74 = scalar_select %p71, %s72, %s73
      %p77 = pneg %p71
      %p78 = scmp.eq.s32.totalorder %s20, 1
      %p79 = por %p77, %p78
      %p80 = scmp.ne.s32.totalorder %s72, %s75
      %p81 = scmp.eq.s32.totalorder %s20, 0
      %p82 = por %p80, %p81
      %p83 = scmp.ne.s32.totalorder %s72, %s75
      %p84 = scmp.eq.s32.totalorder %s25, 1
      %p85 = por %p83, %p84
      %p86 = scmp.ne.s32.totalorder %s75, %s76
      %p87 = scmp.eq.s32.totalorder %s25, 0
      %p88 = por %p86, %p87
      %p89 = scmp.ne.s32.totalorder %s75, %s76
      %p90 = scmp.eq.s32.totalorder %s26, 1
      %p91 = por %p89, %p90
      %p93 = scmp.ne.s32.totalorder %s76, %s92
      %p94 = scmp.eq.s32.totalorder %s26, 0
      %p95 = por %p93, %p94
      %s96 = ssub.s32 %s20, %s27
      %p97 = scmp.eq.s32.totalorder %s96, 0
      %s99 = sadd.s32 %s98, 1
      %s100 = scalar_select %p97, %s98, %s99
      %p103 = pneg %p97
      %p104 = scmp.eq.s32.totalorder %s20, 1
      %p105 = por %p103, %p104
      %p106 = scmp.ne.s32.totalorder %s98, %s101
      %p107 = scmp.eq.s32.totalorder %s20, 0
      %p108 = por %p106, %p107
      %p109 = scmp.ne.s32.totalorder %s98, %s101
      %p110 = scmp.eq.s32.totalorder %s25, 1
      %p111 = por %p109, %p110
      %p112 = scmp.ne.s32.totalorder %s101, %s102
      %p113 = scmp.eq.s32.totalorder %s25, 0
      %p114 = por %p112, %p113
      %p115 = scmp.ne.s32.totalorder %s101, %s102
      %p116 = scmp.eq.s32.totalorder %s26, 1
      %p117 = por %p115, %p116
      %p119 = scmp.ne.s32.totalorder %s102, %s118
      %p120 = scmp.eq.s32.totalorder %s26, 0
      %p121 = por %p119, %p120
      %s122 = ssub.s32 %s20, %s27
      %p123 = scmp.eq.s32.totalorder %s122, 0
      %s125 = sadd.s32 %s124, 1
      %s126 = scalar_select %p123, %s124, %s125
      %p129 = pneg %p123
      %p130 = scmp.eq.s32.totalorder %s20, 1
      %p131 = por %p129, %p130
      %p132 = scmp.ne.s32.totalorder %s124, %s127
      %p133 = scmp.eq.s32.totalorder %s20, 0
      %p134 = por %p132, %p133
      %p135 = scmp.ne.s32.totalorder %s124, %s127
      %p136 = scmp.eq.s32.totalorder %s25, 1
      %p137 = por %p135, %p136
      %p138 = scmp.ne.s32.totalorder %s127, %s128
      %p139 = scmp.eq.s32.totalorder %s25, 0
      %p140 = por %p138, %p139
      %p141 = scmp.ne.s32.totalorder %s127, %s128
      %p142 = scmp.eq.s32.totalorder %s26, 1
      %p143 = por %p141, %p142
      %p145 = scmp.ne.s32.totalorder %s128, %s144
      %p146 = scmp.eq.s32.totalorder %s26, 0
      %p147 = por %p145, %p146
      %s148 = ssub.s32 %s20, %s27
      %p149 = scmp.eq.s32.totalorder %s148, 0
      %s151 = sadd.s32 %s150, 1
      %s152 = scalar_select %p149, %s150, %s151
      %p155 = pneg %p149
      %p156 = scmp.eq.s32.totalorder %s20, 1
      %p157 = por %p155, %p156
      %p158 = scmp.ne.s32.totalorder %s150, %s153
      %p159 = scmp.eq.s32.totalorder %s20, 0
      %p160 = por %p158, %p159
      %p161 = scmp.ne.s32.totalorder %s150, %s153
      %p162 = scmp.eq.s32.totalorder %s25, 1
      %p163 = por %p161, %p162
      %p164 = scmp.ne.s32.totalorder %s153, %s154
      %p165 = scmp.eq.s32.totalorder %s25, 0
      %p166 = por %p164, %p165
      %p167 = scmp.ne.s32.totalorder %s153, %s154
      %p168 = scmp.eq.s32.totalorder %s26, 1
      %p169 = por %p167, %p168
      %p171 = scmp.ne.s32.totalorder %s154, %s170
      %p172 = scmp.eq.s32.totalorder %s26, 0
      %p173 = por %p171, %p172
      %s174 = ssub.s32 %s20, %s27
      %p175 = scmp.eq.s32.totalorder %s174, 0
      %s177 = sadd.s32 %s176, 1
      %s178 = scalar_select %p175, %s176, %s177
      %p181 = pneg %p175
      %p182 = scmp.eq.s32.totalorder %s20, 1
      %p183 = por %p181, %p182
      %p184 = scmp.ne.s32.totalorder %s176, %s179
      %p185 = scmp.eq.s32.totalorder %s20, 0
      %p186 = por %p184, %p185
      %p187 = scmp.ne.s32.totalorder %s176, %s179
      %p188 = scmp.eq.s32.totalorder %s25, 1
      %p189 = por %p187, %p188
      %p190 = scmp.ne.s32.totalorder %s179, %s180
      %p191 = scmp.eq.s32.totalorder %s25, 0
      %p192 = por %p190, %p191
      %p193 = scmp.ne.s32.totalorder %s179, %s180
      %p194 = scmp.eq.s32.totalorder %s26, 1
      %p195 = por %p193, %p194
      %p197 = scmp.ne.s32.totalorder %s180, %s196
      %p198 = scmp.eq.s32.totalorder %s26, 0
      %p199 = por %p197, %p198
      %s200 = ssub.s32 %s20, %s27
      %p201 = scmp.eq.s32.totalorder %s200, 0
      %s203 = sadd.s32 %s202, 1
      %s204 = scalar_select %p201, %s202, %s203
      %p207 = pneg %p201
      %p208 = scmp.eq.s32.totalorder %s20, 1
      %p209 = por %p207, %p208
      %p210 = scmp.ne.s32.totalorder %s202, %s205
      %p211 = scmp.eq.s32.totalorder %s20, 0
      %p212 = por %p210, %p211
      %p213 = scmp.ne.s32.totalorder %s202, %s205
      %p214 = scmp.eq.s32.totalorder %s25, 1
      %p215 = por %p213, %p214
      %p216 = scmp.ne.s32.totalorder %s205, %s206
      %p217 = scmp.eq.s32.totalorder %s25, 0
      %p218 = por %p216, %p217
      %p219 = scmp.ne.s32.totalorder %s205, %s206
      %p220 = scmp.eq.s32.totalorder %s26, 1
      %p221 = por %p219, %p220
      %p223 = scmp.ne.s32.totalorder %s206, %s222
      %p224 = scmp.eq.s32.totalorder %s26, 0
      %p225 = por %p223, %p224
      %s226 = ssub.s32 %s20, %s27
      %p227 = scmp.eq.s32.totalorder %s226, 0
      %s229 = sadd.s32 %s228, 1
      %s230 = scalar_select %p227, %s228, %s229
      %p233 = pneg %p227
      %p234 = scmp.eq.s32.totalorder %s20, 1
      %p235 = por %p233, %p234
      %p236 = scmp.ne.s32.totalorder %s228, %s231
      %p237 = scmp.eq.s32.totalorder %s20, 0
      %p238 = por %p236, %p237
      %p239 = scmp.ne.s32.totalorder %s228, %s231
      %p240 = scmp.eq.s32.totalorder %s25, 1
      %p241 = por %p239, %p240
      %p242 = scmp.ne.s32.totalorder %s231, %s232
      %p243 = scmp.eq.s32.totalorder %s25, 0
      %p244 = por %p242, %p243
      %p245 = scmp.ne.s32.totalorder %s231, %s232
      %p246 = scmp.eq.s32.totalorder %s26, 1
      %p247 = por %p245, %p246
      %p249 = scmp.ne.s32.totalorder %s232, %s248
      %p250 = scmp.eq.s32.totalorder %s26, 0
      %p251 = por %p249, %p250
      %s252 = ssub.s32 %s20, %s27
      %p253 = scmp.eq.s32.totalorder %s252, 0
      %s255 = sadd.s32 %s254, 1
      %s256 = scalar_select %p253, %s254, %s255
      %p259 = pneg %p253
      %p260 = scmp.eq.s32.totalorder %s20, 1
      %p261 = por %p259, %p260
      %p262 = scmp.ne.s32.totalorder %s254, %s257
      %p263 = scmp.eq.s32.totalorder %s20, 0
      %p264 = por %p262, %p263
      %p265 = scmp.ne.s32.totalorder %s254, %s257
      %p266 = scmp.eq.s32.totalorder %s25, 1
      %p267 = por %p265, %p266
      %p268 = scmp.ne.s32.totalorder %s257, %s258
      %p269 = scmp.eq.s32.totalorder %s25, 0
      %p270 = por %p268, %p269
      %p271 = scmp.ne.s32.totalorder %s257, %s258
      %p272 = scmp.eq.s32.totalorder %s26, 1
      %p273 = por %p271, %p272
      %p275 = scmp.ne.s32.totalorder %s258, %s274
      %p276 = scmp.eq.s32.totalorder %s26, 0
      %p277 = por %p275, %p276
      %s279 = sadd.s32 %s278, 1
      %p282 = scmp.eq.s32.totalorder %s20, 1
      %p283 = scmp.ne.s32.totalorder %s278, %s280
      %p284 = scmp.eq.s32.totalorder %s20, 0
      %p285 = por %p283, %p284
      %p286 = scmp.ne.s32.totalorder %s278, %s280
      %p287 = scmp.eq.s32.totalorder %s25, 1
      %p288 = por %p286, %p287
      %p289 = scmp.ne.s32.totalorder %s280, %s281
      %p290 = scmp.eq.s32.totalorder %s25, 0
      %p291 = por %p289, %p290
      %p292 = scmp.ne.s32.totalorder %s280, %s281
      %p293 = scmp.eq.s32.totalorder %s26, 1
      %p294 = por %p292, %p293
      %p296 = scmp.ne.s32.totalorder %s281, %s295
      %p297 = scmp.eq.s32.totalorder %s26, 0
      %p298 = por %p296, %p297
      %s300 = sadd.s32 %s299, 1
      %p303 = scmp.eq.s32.totalorder %s20, 1
      %p304 = scmp.ne.s32.totalorder %s299, %s301
      %p305 = scmp.eq.s32.totalorder %s20, 0
      %p306 = por %p304, %p305
      %p307 = scmp.ne.s32.totalorder %s299, %s301
      %p308 = scmp.eq.s32.totalorder %s25, 1
      %p309 = por %p307, %p308
      %p310 = scmp.ne.s32.totalorder %s301, %s302
      %p311 = scmp.eq.s32.totalorder %s25, 0
      %p312 = por %p310, %p311
      %p313 = scmp.ne.s32.totalorder %s301, %s302
      %p314 = scmp.eq.s32.totalorder %s26, 1
      %p315 = por %p313, %p314
      %p317 = scmp.ne.s32.totalorder %s302, %s316
      %p318 = scmp.eq.s32.totalorder %s26, 0
      %p319 = por %p317, %p318
      %s321 = sadd.s32 %s320, 1
      %p324 = scmp.eq.s32.totalorder %s20, 1
      %p325 = scmp.ne.s32.totalorder %s320, %s322
      %p326 = scmp.eq.s32.totalorder %s20, 0
      %p327 = por %p325, %p326
      %p328 = scmp.ne.s32.totalorder %s320, %s322
      %p329 = scmp.eq.s32.totalorder %s25, 1
      %p330 = por %p328, %p329
      %p331 = scmp.ne.s32.totalorder %s322, %s323
      %p332 = scmp.eq.s32.totalorder %s25, 0
      %p333 = por %p331, %p332
      %p334 = scmp.ne.s32.totalorder %s322, %s323
      %p335 = scmp.eq.s32.totalorder %s26, 1
      %p336 = por %p334, %p335
      %p338 = scmp.ne.s32.totalorder %s323, %s337
      %p339 = scmp.eq.s32.totalorder %s26, 0
      %p340 = por %p338, %p339
      %p341 = scmp.le.s32.totalorder 1, %s20
      %p342 = scmp.lt.s32.totalorder %s20, 3
      %p343 = pnand %p341, %p342
      %p344 = pneg %p343
      // Predicated region
      $region9: #{encoder_forward.1} parent=5 // pred_check
        _
      $region10: #{encoder_forward.1} parent=5 // pred_check_branch
        %346 = sbr.rel (%p343) target = $region12
      $region11: #{encoder_forward.1} parent=5 // pred_region
        %s347 = ssub.s32 %s20, 1
        // Predicated region
        $region13: #{encoder_forward.1} parent=11 // pred_check
          %p348 = pneg %p41
        $region14: #{encoder_forward.1} parent=11 // pred_check_branch
          %350 = sbr.rel (%p348) target = $region16
        $region15: #{encoder_forward.1} parent=11 // pred_region
          _
        $region16: #{encoder_forward.1} parent=11 // pred_fallthru
          _
        // Predicated region
        $region17: #{encoder_forward.1} parent=11 // pred_check
          %p351 = pneg %p62
        $region18: #{encoder_forward.1} parent=11 // pred_check_branch
          %353 = sbr.rel (%p351) target = $region20
        $region19: #{encoder_forward.1} parent=11 // pred_region
          _
        $region20: #{encoder_forward.1} parent=11 // pred_fallthru
          _
      $region12: #{encoder_forward.1} parent=5 // pred_fallthru
        _
      %p354 = scmp.lt.s32.totalorder %s20, 2
      // Predicated region
      $region21: #{encoder_forward.1} parent=5 // pred_check
        %p355 = pneg %p354
      $region22: #{encoder_forward.1} parent=5 // pred_check_branch
        %357 = sbr.rel (%p355) target = $region24
      $region23: #{encoder_forward.1} parent=5 // pred_region
        // Predicated region
        $region25: #{encoder_forward.1} parent=23 // pred_check
          %p358 = pneg %p82
        $region26: #{encoder_forward.1} parent=23 // pred_check_branch
          %360 = sbr.rel (%p358) target = $region28
        $region27: #{encoder_forward.1} parent=23 // pred_region
          %p361 = scmp.lt.s32.totalorder %s20, 1
          %s362 = scalar_select %p361, %s20, 1
          %s363 = smul.addr %s362, 4
          %s364 = smul.addr %s363, 4
          %s365 = scalar_lea.vmem %s2, %s364
        $region28: #{encoder_forward.1} parent=23 // pred_fallthru
          _
        // Predicated region
        $region29: #{encoder_forward.1} parent=23 // pred_check
          %p366 = pneg %p108
        $region30: #{encoder_forward.1} parent=23 // pred_check_branch
          %368 = sbr.rel (%p366) target = $region32
        $region31: #{encoder_forward.1} parent=23 // pred_region
          %p369 = scmp.lt.s32.totalorder %s20, 1
          %s370 = scalar_select %p369, %s20, 1
          %s371 = scalar_lea.vmem %s3, %s370
        $region32: #{encoder_forward.1} parent=23 // pred_fallthru
          _
        // Predicated region
        $region33: #{encoder_forward.1} parent=23 // pred_check
          %p372 = pneg %p134
        $region34: #{encoder_forward.1} parent=23 // pred_check_branch
          %374 = sbr.rel (%p372) target = $region36
        $region35: #{encoder_forward.1} parent=23 // pred_region
          %p375 = scmp.lt.s32.totalorder %s20, 1
          %s376 = scalar_select %p375, %s20, 1
          %s377 = smul.addr %s376, 4
          %s378 = smul.addr %s377, 4
          %s379 = scalar_lea.vmem %s4, %s378
        $region36: #{encoder_forward.1} parent=23 // pred_fallthru
          _
        // Predicated region
        $region37: #{encoder_forward.1} parent=23 // pred_check
          %p380 = pneg %p160
        $region38: #{encoder_forward.1} parent=23 // pred_check_branch
          %382 = sbr.rel (%p380) target = $region40
        $region39: #{encoder_forward.1} parent=23 // pred_region
          %p383 = scmp.lt.s32.totalorder %s20, 1
          %s384 = scalar_select %p383, %s20, 1
          %s385 = scalar_lea.vmem %s5, %s384
        $region40: #{encoder_forward.1} parent=23 // pred_fallthru
          _
        // Predicated region
        $region41: #{encoder_forward.1} parent=23 // pred_check
          %p386 = pneg %p186
        $region42: #{encoder_forward.1} parent=23 // pred_check_branch
          %388 = sbr.rel (%p386) target = $region44
        $region43: #{encoder_forward.1} parent=23 // pred_region
          %p389 = scmp.lt.s32.totalorder %s20, 1
          %s390 = scalar_select %p389, %s20, 1
          %s391 = smul.addr %s390, 4
          %s392 = smul.addr %s391, 4
          %s393 = scalar_lea.vmem %s6, %s392
        $region44: #{encoder_forward.1} parent=23 // pred_fallthru
          _
        // Predicated region
        $region45: #{encoder_forward.1} parent=23 // pred_check
          %p394 = pneg %p212
        $region46: #{encoder_forward.1} parent=23 // pred_check_branch
          %396 = sbr.rel (%p394) target = $region48
        $region47: #{encoder_forward.1} parent=23 // pred_region
          %p397 = scmp.lt.s32.totalorder %s20, 1
          %s398 = scalar_select %p397, %s20, 1
          %s399 = smul.addr %s398, 4
          %s400 = smul.addr %s399, 4
          %s401 = scalar_lea.vmem %s7, %s400
        $region48: #{encoder_forward.1} parent=23 // pred_fallthru
          _
        // Predicated region
        $region49: #{encoder_forward.1} parent=23 // pred_check
          %p402 = pneg %p238
        $region50: #{encoder_forward.1} parent=23 // pred_check_branch
          %404 = sbr.rel (%p402) target = $region52
        $region51: #{encoder_forward.1} parent=23 // pred_region
          %p405 = scmp.lt.s32.totalorder %s20, 1
          %s406 = scalar_select %p405, %s20, 1
          %s407 = smul.addr %s406, 4
          %s408 = smul.addr %s407, 4
          %s409 = scalar_lea.vmem %s8, %s408
        $region52: #{encoder_forward.1} parent=23 // pred_fallthru
          _
        // Predicated region
        $region53: #{encoder_forward.1} parent=23 // pred_check
          %p410 = pneg %p264
        $region54: #{encoder_forward.1} parent=23 // pred_check_branch
          %412 = sbr.rel (%p410) target = $region56
        $region55: #{encoder_forward.1} parent=23 // pred_region
          %p413 = scmp.lt.s32.totalorder %s20, 1
          %s414 = scalar_select %p413, %s20, 1
          %s415 = scalar_lea.vmem %s9, %s414
        $region56: #{encoder_forward.1} parent=23 // pred_fallthru
          _
      $region24: #{encoder_forward.1} parent=5 // pred_fallthru
        _
      %p416 = scmp.le.s32.totalorder 1, %s20
      %p417 = scmp.lt.s32.totalorder %s20, 3
      %p418 = pnand %p416, %p417
      %p419 = pneg %p418
      // Predicated region
      $region57: #{encoder_forward.1} parent=5 // pred_check
        _
      $region58: #{encoder_forward.1} parent=5 // pred_check_branch
        %421 = sbr.rel (%p418) target = $region60
      $region59: #{encoder_forward.1} parent=5 // pred_region
        %s422 = ssub.s32 %s20, 1
        %p423 = pneg %p41
        %p424 = pneg %p38
        %p425 = pneg %p62
        %p426 = pneg %p59
        %p427 = scmp.lt.s32.totalorder %s25, 1
        %s428 = scalar_select %p427, %s25, 1
        %s429 = smul.addr %s428, 4
        %s430 = smul.addr %s429, 4
        %s431 = scalar_lea.vmem %s2, %s430
        %p432 = pneg %p88
        %p433 = pneg %p85
        %p434 = scmp.lt.s32.totalorder %s25, 1
        %s435 = scalar_select %p434, %s25, 1
        %s436 = scalar_lea.vmem %s3, %s435
        %p437 = pneg %p114
        %p438 = pneg %p111
        %p439 = scmp.lt.s32.totalorder %s25, 1
        %s440 = scalar_select %p439, %s25, 1
        %s441 = smul.addr %s440, 4
        %s442 = smul.addr %s441, 4
        %s443 = scalar_lea.vmem %s4, %s442
        %p444 = pneg %p140
        %p445 = pneg %p137
        %p446 = scmp.lt.s32.totalorder %s25, 1
        %s447 = scalar_select %p446, %s25, 1
        %s448 = scalar_lea.vmem %s5, %s447
        %p449 = pneg %p166
        %p450 = pneg %p163
        %p451 = scmp.lt.s32.totalorder %s25, 1
        %s452 = scalar_select %p451, %s25, 1
        %s453 = smul.addr %s452, 4
        %s454 = smul.addr %s453, 4
        %s455 = scalar_lea.vmem %s6, %s454
        %p456 = pneg %p192
        %p457 = pneg %p189
        %p458 = scmp.lt.s32.totalorder %s25, 1
        %s459 = scalar_select %p458, %s25, 1
        %s460 = smul.addr %s459, 4
        %s461 = smul.addr %s460, 4
        %s462 = scalar_lea.vmem %s7, %s461
        %p463 = pneg %p218
        %p464 = pneg %p215
        %p465 = scmp.lt.s32.totalorder %s25, 1
        %s466 = scalar_select %p465, %s25, 1
        %s467 = smul.addr %s466, 4
        %s468 = smul.addr %s467, 4
        %s469 = scalar_lea.vmem %s8, %s468
        %p470 = pneg %p244
        %p471 = pneg %p241
        %p472 = scmp.lt.s32.totalorder %s25, 1
        %s473 = scalar_select %p472, %s25, 1
        %s474 = scalar_lea.vmem %s9, %s473
        %p475 = pneg %p270
        %p476 = pneg %p267
        %p477 = pneg %p291
        %p478 = pneg %p288
        %p479 = pneg %p312
        %p480 = pneg %p309
        %p481 = pneg %p333
        %p482 = pneg %p330
        %p483 = scmp.lt.s32.totalorder %s25, 1
        %s484 = scalar_select %p483, %s25, 1
        %s485 = smul.addr %s484, 4
        %s486 = smul.addr %s485, 4
        %s487 = scalar_lea.vmem %s2, %s486
        %p488 = scmp.lt.s32.totalorder %s25, 1
        %s489 = scalar_select %p488, %s25, 1
        %s490 = scalar_lea.vmem %s3, %s489
        %p491 = scmp.lt.s32.totalorder %s25, 1
        %s492 = scalar_select %p491, %s25, 1
        %s493 = smul.addr %s492, 4
        %s494 = smul.addr %s493, 4
        %s495 = scalar_lea.vmem %s4, %s494
        %p496 = scmp.lt.s32.totalorder %s25, 1
        %s497 = scalar_select %p496, %s25, 1
        %s498 = scalar_lea.vmem %s5, %s497
        %p499 = scmp.lt.s32.totalorder %s25, 1
        %s500 = scalar_select %p499, %s25, 1
        %s501 = smul.addr %s500, 4
        %s502 = smul.addr %s501, 4
        %s503 = scalar_lea.vmem %s6, %s502
        %p504 = scmp.lt.s32.totalorder %s25, 1
        %s505 = scalar_select %p504, %s25, 1
        %s506 = smul.addr %s505, 4
        %s507 = smul.addr %s506, 4
        %s508 = scalar_lea.vmem %s7, %s507
        %p509 = scmp.lt.s32.totalorder %s25, 1
        %s510 = scalar_select %p509, %s25, 1
        %s511 = smul.addr %s510, 4
        %s512 = smul.addr %s511, 4
        %s513 = scalar_lea.vmem %s8, %s512
        %p514 = scmp.lt.s32.totalorder %s25, 1
        %s515 = scalar_select %p514, %s25, 1
        %s516 = scalar_lea.vmem %s9, %s515
        %p518 = scmp.eq.s32.totalorder %s25, 0
        // Predicated region
        $region61: #{encoder_forward.1} parent=59 // pred_check
          %p519 = pneg %p518
        $region62: #{encoder_forward.1} parent=59 // pred_check_branch
          %521 = sbr.rel (%p519) target = $region64
        $region63: #{encoder_forward.1} parent=59 // pred_region
          %v522 = vld [vmem:[%s0] sm:$0xff]
          %v523 = vld [vmem:[%s0 + $0x8] sm:$0xff]
          %vm524 = vcmask 261120
          %525 = vst.msk [vmem:[#allocation2] sm:$0xff] %vm524, %v522
          %526 = vst.msk [vmem:[#allocation2 + $0x8] sm:$0xff] %vm524, %v523
        $region64: #{encoder_forward.1} parent=59 // pred_fallthru
          _
        %v527 = vld [vmem:[#allocation2] sm:$0xff]
        %v528 = vld [vmem:[#allocation2 + $0x8] sm:$0xff]
        %v529 = vpack.c.bf16 %v528, %v527
        %v530 = vld [vmem:[%s487] sm:$0xf]
        %v531 = vld [vmem:[%s487 + $0x4] sm:$0xf]
        %v532 = vld [vmem:[%s487 + $0x8] sm:$0xf]
        %v533 = vld [vmem:[%s487 + $0xc] sm:$0xf]
        %v534 = vld [vmem:[%s490] sm:$0x1]
        %v536 = vlaneseq
        %v537 = vshrl.u32 %v536, 7
        %v538 = vsub.s32 0, %v537
        %v539 = vrot.slane %v534, %v538
        %v545 = vunpack.c.l.b16 %v530
        %v546 = vunpack.c.l.b16 %v531
        %v547 = vunpack.c.l.b16 %v532
        %v548 = vunpack.c.l.b16 %v533
        %v549 = vpack.c.b16 %v546, %v545
        %v550 = vpack.c.b16 %v548, %v547
        %vm553 = vcmask 261120
        %v555 = vsel %vm553, %v529, 0
        %557 = vmatprep.subr.bf16.mxu0 0
        %558 = vmatpush1.bf16.msra.mxu0 0
        %559 = vmatprep.subr.bf16.mxu0 0
        %560 = vmatpush1.bf16.msra.mxu0 0
        %561 = vmatprep.subr.bf16.mxu0 0
        %562 = vmatpush1.bf16.msra.mxu0 0
        %563 = vmatprep.subr.bf16.mxu0 0
        %564 = vmatpush1.bf16.msra.mxu0 0
        %565 = vmatprep.subr.bf16.mxu0 0
        %566 = vmatpush1.bf16.msra.mxu0 0
        %567 = vmatprep.subr.bf16.mxu0 0
        %568 = vmatpush1.bf16.msra.mxu0 0
        %569 = vmatprep.subr.bf16.mxu0 0
        %570 = vmatpush1.bf16.msra.mxu0 %v550
        %571 = vmatprep.subr.bf16.mxu0 0
        %572 = vmatpush1.bf16.msra.mxu0 %v549
        %573 = vmatprep.subr.bf16.mxu0 0
        %574 = vmatpush2.bf16.msra.mxu0 0
        %575 = vmatprep.subr.bf16.mxu0 0
        %576 = vmatpush2.bf16.msra.mxu0 0
        %577 = vmatprep.subr.bf16.mxu0 0
        %578 = vmatpush2.bf16.msra.mxu0 0
        %579 = vmatprep.subr.bf16.mxu0 0
        %580 = vmatpush2.bf16.msra.mxu0 0
        %581 = vmatprep.subr.bf16.mxu0 0
        %582 = vmatpush2.bf16.msra.mxu0 0
        %583 = vmatprep.subr.bf16.mxu0 0
        %584 = vmatpush2.bf16.msra.mxu0 0
        %585 = vmatprep.subr.bf16.mxu0 0
        %586 = vmatpush2.bf16.msra.mxu0 0
        %587 = vmatprep.subr.bf16.mxu0 0
        %588 = vmatpush2.bf16.msra.mxu0 0
        %589 = vmatprep.mubr.bf16.mxu0 0
        %590 = vmatmul.mubr.bf16.gmra.mxu0 %v555
        %v591 = vpop.f32.mrf.mxu0
        %v592 = vadd.f32 %v539, %v591
        %v593 = vpop.f32.mrf.mxu0
        %v594 = vpop.f32.mrf.mxu0
        %v595 = vadd.f32 %v539, %v594
        %v596 = vpop.f32.mrf.mxu0
        %597 = vdwg.mxu0
        %600 = vrot.lane.b32.xlu0 %v592, 120
        %v601 = vpop.permute.xlu0 %600
        %602 = vrot.lane.b32.xlu0 %v595, 120
        %v603 = vpop.permute.xlu0 %602
        %604 = vrot.lane.b32.xlu0 %v592, 112
        %v605 = vpop.permute.xlu0 %604
        %606 = vrot.lane.b32.xlu0 %v595, 112
        %v607 = vpop.permute.xlu0 %606
        %608 = vrot.lane.b32.xlu0 %v592, 104
        %v609 = vpop.permute.xlu0 %608
        %610 = vrot.lane.b32.xlu0 %v595, 104
        %v611 = vpop.permute.xlu0 %610
        %612 = vrot.lane.b32.xlu0 %v592, 96
        %v613 = vpop.permute.xlu0 %612
        %614 = vrot.lane.b32.xlu0 %v595, 96
        %v615 = vpop.permute.xlu0 %614
        %616 = vrot.lane.b32.xlu0 %v601, 96
        %v617 = vpop.permute.xlu0 %616
        %618 = vrot.lane.b32.xlu0 %v603, 96
        %v619 = vpop.permute.xlu0 %618
        %620 = vrot.lane.b32.xlu0 %v605, 96
        %v621 = vpop.permute.xlu0 %620
        %622 = vrot.lane.b32.xlu0 %v607, 96
        %v623 = vpop.permute.xlu0 %622
        %624 = vrot.lane.b32.xlu0 %v609, 96
        %v625 = vpop.permute.xlu0 %624
        %626 = vrot.lane.b32.xlu0 %v611, 96
        %v627 = vpop.permute.xlu0 %626
        %vm628 = vcmask 64512
        %v629 = vsel %vm628, %v592, 0
        %v631 = vsel %vm628, %v595, 0
        %v633 = vsel %vm628, %v601, 0
        %v635 = vsel %vm628, %v603, 0
        %v637 = vsel %vm628, %v605, 0
        %v639 = vsel %vm628, %v607, 0
        %v641 = vsel %vm628, %v609, 0
        %v643 = vsel %vm628, %v611, 0
        %v645 = vsel %vm628, %v613, 0
        %v647 = vsel %vm628, %v615, 0
        %v649 = vsel %vm628, %v617, 0
        %v651 = vsel %vm628, %v619, 0
        %v653 = vsel %vm628, %v621, 0
        %v655 = vsel %vm628, %v623, 0
        %v657 = vsel %vm628, %v625, 0
        %v659 = vsel %vm628, %v627, 0
        %661 = vmatprep.subr.mxu0 0.0
        %662 = vmatpush1.xpose.msra.mxu0 0.0
        %663 = vmatprep.subr.mxu0 0.0
        %664 = vmatpush1.xpose.msra.mxu0 0.0
        %665 = vmatprep.subr.mxu0 0.0
        %666 = vmatpush1.xpose.msra.mxu0 0.0
        %667 = vmatprep.subr.mxu0 0.0
        %668 = vmatpush1.xpose.msra.mxu0 0.0
        %669 = vmatprep.subr.mxu0 0.0
        %670 = vmatpush1.xpose.msra.mxu0 0.0
        %671 = vmatprep.subr.mxu0 0.0
        %672 = vmatpush1.xpose.msra.mxu0 0.0
        %673 = vmatprep.subr.mxu0 0.0
        %674 = vmatpush1.xpose.msra.mxu0 0.0
        %675 = vmatprep.subr.mxu0 0.0
        %676 = vmatpush1.xpose.msra.mxu0 0.0
        %677 = vmatprep.subr.mxu0 0.0
        %678 = vmatpush1.xpose.msra.mxu0 %v659
        %679 = vmatprep.subr.mxu0 0.0
        %680 = vmatpush1.xpose.msra.mxu0 %v657
        %681 = vmatprep.subr.mxu0 0.0
        %682 = vmatpush1.xpose.msra.mxu0 %v655
        %683 = vmatprep.subr.mxu0 0.0
        %684 = vmatpush1.xpose.msra.mxu0 %v653
        %685 = vmatprep.subr.mxu0 0.0
        %686 = vmatpush1.xpose.msra.mxu0 %v651
        %687 = vmatprep.subr.mxu0 0.0
        %688 = vmatpush1.xpose.msra.mxu0 %v649
        %689 = vmatprep.subr.mxu0 0.0
        %690 = vmatpush1.xpose.msra.mxu0 %v647
        %691 = vmatprep.subr.mxu0 0.0
        %692 = vmatpush1.xpose.msra.mxu0 %v645
        %693 = vmatprep.subr.mxu0 0.0
        %694 = vmatpush2.xpose.msra.mxu0 0.0
        %695 = vmatprep.subr.mxu0 0.0
        %696 = vmatpush2.xpose.msra.mxu0 0.0
        %697 = vmatprep.subr.mxu0 0.0
        %698 = vmatpush2.xpose.msra.mxu0 0.0
        %699 = vmatprep.subr.mxu0 0.0
        %700 = vmatpush2.xpose.msra.mxu0 0.0
        %701 = vmatprep.subr.mxu0 0.0
        %702 = vmatpush2.xpose.msra.mxu0 0.0
        %703 = vmatprep.subr.mxu0 0.0
        %704 = vmatpush2.xpose.msra.mxu0 0.0
        %705 = vmatprep.subr.mxu0 0.0
        %706 = vmatpush2.xpose.msra.mxu0 0.0
        %707 = vmatprep.subr.mxu0 0.0
        %708 = vmatpush2.xpose.msra.mxu0 0.0
        %709 = vmatprep.subr.mxu0 0.0
        %710 = vmatpush2.xpose.msra.mxu0 0.0
        %711 = vmatprep.subr.mxu0 0.0
        %712 = vmatpush2.xpose.msra.mxu0 0.0
        %713 = vmatprep.subr.mxu0 0.0
        %714 = vmatpush2.xpose.msra.mxu0 0.0
        %715 = vmatprep.subr.mxu0 0.0
        %716 = vmatpush2.xpose.msra.mxu0 0.0
        %717 = vmatprep.subr.mxu0 0.0
        %718 = vmatpush2.xpose.msra.mxu0 0.0
        %719 = vmatprep.subr.mxu0 0.0
        %720 = vmatpush2.xpose.msra.mxu0 0.0
        %721 = vmatprep.subr.mxu0 0.0
        %722 = vmatpush2.xpose.msra.mxu0 0.0
        %723 = vmatprep.subr.mxu0 0.0
        %724 = vmatpush2.xpose.msra.mxu0 0.0
        %725 = vmatprep.mubr.f32.mxu0 0.0
        %726 = vmatmul.mubr.f32.gmra.mxu0 %v629
        %v727 = vpop.f32.mrf.mxu0
        %v728 = vadd.f32 0.0, %v727
        %v729 = vpop.f32.mrf.mxu0
        %730 = vmatprep.mubr.f32.mxu0 0.0
        %731 = vmatmul.mubr.f32.gmra.mxu0 %v631
        %v732 = vpop.f32.mrf.mxu0
        %v733 = vadd.f32 0.0, %v732
        %v734 = vpop.f32.mrf.mxu0
        %735 = vmatprep.mubr.f32.mxu0 0.0
        %736 = vmatmul.mubr.f32.gmra.mxu0 %v633
        %v737 = vpop.f32.mrf.mxu0
        %v738 = vadd.f32 0.0, %v737
        %v739 = vpop.f32.mrf.mxu0
        %740 = vmatprep.mubr.f32.mxu0 0.0
        %741 = vmatmul.mubr.f32.gmra.mxu0 %v635
        %v742 = vpop.f32.mrf.mxu0
        %v743 = vadd.f32 0.0, %v742
        %v744 = vpop.f32.mrf.mxu0
        %745 = vmatprep.mubr.f32.mxu0 0.0
        %746 = vmatmul.mubr.f32.gmra.mxu0 %v637
        %v747 = vpop.f32.mrf.mxu0
        %v748 = vadd.f32 0.0, %v747
        %v749 = vpop.f32.mrf.mxu0
        %750 = vmatprep.mubr.f32.mxu0 0.0
        %751 = vmatmul.mubr.f32.gmra.mxu0 %v639
        %v752 = vpop.f32.mrf.mxu0
        %v753 = vadd.f32 0.0, %v752
        %v754 = vpop.f32.mrf.mxu0
        %755 = vmatprep.mubr.f32.mxu0 0.0
        %756 = vmatmul.mubr.f32.gmra.mxu0 %v641
        %v757 = vpop.f32.mrf.mxu0
        %v758 = vadd.f32 0.0, %v757
        %v759 = vpop.f32.mrf.mxu0
        %760 = vmatprep.mubr.f32.mxu0 0.0
        %761 = vmatmul.mubr.f32.gmra.mxu0 %v643
        %v762 = vpop.f32.mrf.mxu0
        %v763 = vadd.f32 0.0, %v762
        %v764 = vpop.f32.mrf.mxu0
        %765 = vdwg.mxu0
        %v766 = vmul.f32 %v728, 0.25
        %v767 = vmul.f32 %v733, 0.25
        %v768 = vmul.f32 %v738, 0.25
        %v769 = vmul.f32 %v743, 0.25
        %v770 = vmul.f32 %v748, 0.25
        %v771 = vmul.f32 %v753, 0.25
        %v772 = vmul.f32 %v758, 0.25
        %v773 = vmul.f32 %v763, 0.25
        %v774 = vld [vmem:[%s1] sm:$0xff]
        %v775 = vld [vmem:[%s1 + $0x8] sm:$0xff]
        %v776 = vld [vmem:[%s1 + $0x10] sm:$0xff]
        %v777 = vld [vmem:[%s1 + $0x18] sm:$0xff]
        %v778 = vld [vmem:[%s1 + $0x20] sm:$0xff]
        %v779 = vld [vmem:[%s1 + $0x28] sm:$0xff]
        %v780 = vld [vmem:[%s1 + $0x30] sm:$0xff]
        %v781 = vld [vmem:[%s1 + $0x38] sm:$0xff]
        %v782 = vadd.f32 %v766, %v774
        %v783 = vadd.f32 %v767, %v775
        %v784 = vadd.f32 %v768, %v776
        %v785 = vadd.f32 %v769, %v777
        %v786 = vadd.f32 %v770, %v778
        %v787 = vadd.f32 %v771, %v779
        %v788 = vadd.f32 %v772, %v780
        %v789 = vadd.f32 %v773, %v781
        %vm790 = vcmask 523264
        %v791 = vsel %vm790, %v782, -inf
        %792 = vmax.xlane.f32.xlu0 %v791
        %v793 = vpop.xlane.xlu0 %792
        %v794 = vsel %vm790, %v783, -inf
        %795 = vmax.xlane.f32.xlu0 %v794
        %v796 = vpop.xlane.xlu0 %795
        %v797 = vsel %vm790, %v784, -inf
        %798 = vmax.xlane.f32.xlu0 %v797
        %v799 = vpop.xlane.xlu0 %798
        %v800 = vsel %vm790, %v785, -inf
        %801 = vmax.xlane.f32.xlu0 %v800
        %v802 = vpop.xlane.xlu0 %801
        %v803 = vsel %vm790, %v786, -inf
        %804 = vmax.xlane.f32.xlu0 %v803
        %v805 = vpop.xlane.xlu0 %804
        %v806 = vsel %vm790, %v787, -inf
        %807 = vmax.xlane.f32.xlu0 %v806
        %v808 = vpop.xlane.xlu0 %807
        %v809 = vsel %vm790, %v788, -inf
        %810 = vmax.xlane.f32.xlu0 %v809
        %v811 = vpop.xlane.xlu0 %810
        %v812 = vsel %vm790, %v789, -inf
        %813 = vmax.xlane.f32.xlu0 %v812
        %v814 = vpop.xlane.xlu0 %813
        %v815 = vsub.f32 %v782, %v793
        %v816 = vsub.f32 %v783, %v796
        %v817 = vsub.f32 %v784, %v799
        %v818 = vsub.f32 %v785, %v802
        %v819 = vsub.f32 %v786, %v805
        %v820 = vsub.f32 %v787, %v808
        %v821 = vsub.f32 %v788, %v811
        %v822 = vsub.f32 %v789, %v814
        %v823 = vmul.f32 %v815, 1.442695
        %v824 = vpow.pop %v823
        %v825 = vmul.f32 %v816, 1.442695
        %v826 = vpow.pop %v825
        %v827 = vmul.f32 %v817, 1.442695
        %v828 = vpow.pop %v827
        %v829 = vmul.f32 %v818, 1.442695
        %v830 = vpow.pop %v829
        %v831 = vmul.f32 %v819, 1.442695
        %v832 = vpow.pop %v831
        %v833 = vmul.f32 %v820, 1.442695
        %v834 = vpow.pop %v833
        %v835 = vmul.f32 %v821, 1.442695
        %v836 = vpow.pop %v835
        %v837 = vmul.f32 %v822, 1.442695
        %v838 = vpow.pop %v837
        %v839 = vsel %vm790, %v824, 0.0
        %840 = vadd.xlane.f32.xlu0 %v839
        %v841 = vpop.xlane.xlu0 %840
        %v842 = vsel %vm790, %v826, 0.0
        %843 = vadd.xlane.f32.xlu0 %v842
        %v844 = vpop.xlane.xlu0 %843
        %v845 = vsel %vm790, %v828, 0.0
        %846 = vadd.xlane.f32.xlu0 %v845
        %v847 = vpop.xlane.xlu0 %846
        %v848 = vsel %vm790, %v830, 0.0
        %849 = vadd.xlane.f32.xlu0 %v848
        %v850 = vpop.xlane.xlu0 %849
        %v851 = vsel %vm790, %v832, 0.0
        %852 = vadd.xlane.f32.xlu0 %v851
        %v853 = vpop.xlane.xlu0 %852
        %v854 = vsel %vm790, %v834, 0.0
        %855 = vadd.xlane.f32.xlu0 %v854
        %v856 = vpop.xlane.xlu0 %855
        %v857 = vsel %vm790, %v836, 0.0
        %858 = vadd.xlane.f32.xlu0 %v857
        %v859 = vpop.xlane.xlu0 %858
        %v860 = vsel %vm790, %v838, 0.0
        %861 = vadd.xlane.f32.xlu0 %v860
        %v862 = vpop.xlane.xlu0 %861
        %v863 = vrcp.pop %v841
        %v864 = vmul.f32 %v824, %v863
        %v865 = vrcp.pop %v844
        %v866 = vmul.f32 %v826, %v865
        %v867 = vrcp.pop %v847
        %v868 = vmul.f32 %v828, %v867
        %v869 = vrcp.pop %v850
        %v870 = vmul.f32 %v830, %v869
        %v871 = vrcp.pop %v853
        %v872 = vmul.f32 %v832, %v871
        %v873 = vrcp.pop %v856
        %v874 = vmul.f32 %v834, %v873
        %v875 = vrcp.pop %v859
        %v876 = vmul.f32 %v836, %v875
        %v877 = vrcp.pop %v862
        %v878 = vmul.f32 %v838, %v877
        %879 = vst.msk [vmem:[%s12] sm:$0xff] %vm790, %v864
        %880 = vst.msk [vmem:[%s12 + $0x8] sm:$0xff] %vm790, %v866
        %881 = vst.msk [vmem:[%s12 + $0x10] sm:$0xff] %vm790, %v868
        %882 = vst.msk [vmem:[%s12 + $0x18] sm:$0xff] %vm790, %v870
        %883 = vst.msk [vmem:[%s12 + $0x20] sm:$0xff] %vm790, %v872
        %884 = vst.msk [vmem:[%s12 + $0x28] sm:$0xff] %vm790, %v874
        %885 = vst.msk [vmem:[%s12 + $0x30] sm:$0xff] %vm790, %v876
        %886 = vst.msk [vmem:[%s12 + $0x38] sm:$0xff] %vm790, %v878
        %887 = vrot.lane.b32.xlu0 %v592, 64
        %v888 = vpop.permute.xlu0 %887
        %889 = vrot.lane.b32.xlu0 %v595, 64
        %v890 = vpop.permute.xlu0 %889
        %891 = vrot.lane.b32.xlu0 %v601, 64
        %v892 = vpop.permute.xlu0 %891
        %893 = vrot.lane.b32.xlu0 %v603, 64
        %v894 = vpop.permute.xlu0 %893
        %895 = vrot.lane.b32.xlu0 %v605, 64
        %v896 = vpop.permute.xlu0 %895
        %897 = vrot.lane.b32.xlu0 %v607, 64
        %v898 = vpop.permute.xlu0 %897
        %899 = vrot.lane.b32.xlu0 %v609, 64
        %v900 = vpop.permute.xlu0 %899
        %901 = vrot.lane.b32.xlu0 %v611, 64
        %v902 = vpop.permute.xlu0 %901
        %v912 = vsel %vm790, %v864, 0
        %v915 = vsel %vm790, %v866, 0
        %v918 = vsel %vm790, %v868, 0
        %v921 = vsel %vm790, %v870, 0
        %v924 = vsel %vm790, %v872, 0
        %v927 = vsel %vm790, %v874, 0
        %v930 = vsel %vm790, %v876, 0
        %v933 = vsel %vm790, %v878, 0
        %935 = vmatprep.subr.mxu0 0.0
        %936 = vmatpush1.msra.mxu0 0.0
        %937 = vmatprep.subr.mxu0 0.0
        %938 = vmatpush1.msra.mxu0 0.0
        %939 = vmatprep.subr.mxu0 0.0
        %940 = vmatpush1.msra.mxu0 0.0
        %941 = vmatprep.subr.mxu0 0.0
        %942 = vmatpush1.msra.mxu0 0.0
        %943 = vmatprep.subr.mxu0 0.0
        %944 = vmatpush1.msra.mxu0 0.0
        %945 = vmatprep.subr.mxu0 0.0
        %946 = vmatpush1.msra.mxu0 0.0
        %947 = vmatprep.subr.mxu0 0.0
        %948 = vmatpush1.msra.mxu0 0.0
        %949 = vmatprep.subr.mxu0 0.0
        %950 = vmatpush1.msra.mxu0 0.0
        %951 = vmatprep.subr.mxu0 0.0
        %952 = vmatpush1.msra.mxu0 %v902
        %953 = vmatprep.subr.mxu0 0.0
        %954 = vmatpush1.msra.mxu0 %v900
        %955 = vmatprep.subr.mxu0 0.0
        %956 = vmatpush1.msra.mxu0 %v898
        %957 = vmatprep.subr.mxu0 0.0
        %958 = vmatpush1.msra.mxu0 %v896
        %959 = vmatprep.subr.mxu0 0.0
        %960 = vmatpush1.msra.mxu0 %v894
        %961 = vmatprep.subr.mxu0 0.0
        %962 = vmatpush1.msra.mxu0 %v892
        %963 = vmatprep.subr.mxu0 0.0
        %964 = vmatpush1.msra.mxu0 %v890
        %965 = vmatprep.subr.mxu0 0.0
        %966 = vmatpush1.msra.mxu0 %v888
        %967 = vmatprep.subr.mxu0 0.0
        %968 = vmatpush2.msra.mxu0 0.0
        %969 = vmatprep.subr.mxu0 0.0
        %970 = vmatpush2.msra.mxu0 0.0
        %971 = vmatprep.subr.mxu0 0.0
        %972 = vmatpush2.msra.mxu0 0.0
        %973 = vmatprep.subr.mxu0 0.0
        %974 = vmatpush2.msra.mxu0 0.0
        %975 = vmatprep.subr.mxu0 0.0
        %976 = vmatpush2.msra.mxu0 0.0
        %977 = vmatprep.subr.mxu0 0.0
        %978 = vmatpush2.msra.mxu0 0.0
        %979 = vmatprep.subr.mxu0 0.0
        %980 = vmatpush2.msra.mxu0 0.0
        %981 = vmatprep.subr.mxu0 0.0
        %982 = vmatpush2.msra.mxu0 0.0
        %983 = vmatprep.subr.mxu0 0.0
        %984 = vmatpush2.msra.mxu0 0.0
        %985 = vmatprep.subr.mxu0 0.0
        %986 = vmatpush2.msra.mxu0 0.0
        %987 = vmatprep.subr.mxu0 0.0
        %988 = vmatpush2.msra.mxu0 0.0
        %989 = vmatprep.subr.mxu0 0.0
        %990 = vmatpush2.msra.mxu0 0.0
        %991 = vmatprep.subr.mxu0 0.0
        %992 = vmatpush2.msra.mxu0 0.0
        %993 = vmatprep.subr.mxu0 0.0
        %994 = vmatpush2.msra.mxu0 0.0
        %995 = vmatprep.subr.mxu0 0.0
        %996 = vmatpush2.msra.mxu0 0.0
        %997 = vmatprep.subr.mxu0 0.0
        %998 = vmatpush2.msra.mxu0 0.0
        %999 = vmatprep.mubr.f32.mxu0 0.0
        %1000 = vmatmul.mubr.f32.gmra.mxu0 %v912
        %v1001 = vpop.f32.mrf.mxu0
        %v1002 = vadd.f32 0.0, %v1001
        %v1003 = vpop.f32.mrf.mxu0
        %1004 = vmatprep.mubr.f32.mxu0 0.0
        %1005 = vmatmul.mubr.f32.gmra.mxu0 %v915
        %v1006 = vpop.f32.mrf.mxu0
        %v1007 = vadd.f32 0.0, %v1006
        %v1008 = vpop.f32.mrf.mxu0
        %1009 = vmatprep.mubr.f32.mxu0 0.0
        %1010 = vmatmul.mubr.f32.gmra.mxu0 %v918
        %v1011 = vpop.f32.mrf.mxu0
        %v1012 = vadd.f32 0.0, %v1011
        %v1013 = vpop.f32.mrf.mxu0
        %1014 = vmatprep.mubr.f32.mxu0 0.0
        %1015 = vmatmul.mubr.f32.gmra.mxu0 %v921
        %v1016 = vpop.f32.mrf.mxu0
        %v1017 = vadd.f32 0.0, %v1016
        %v1018 = vpop.f32.mrf.mxu0
        %1019 = vmatprep.mubr.f32.mxu0 0.0
        %1020 = vmatmul.mubr.f32.gmra.mxu0 %v924
        %v1021 = vpop.f32.mrf.mxu0
        %v1022 = vadd.f32 0.0, %v1021
        %v1023 = vpop.f32.mrf.mxu0
        %1024 = vmatprep.mubr.f32.mxu0 0.0
        %1025 = vmatmul.mubr.f32.gmra.mxu0 %v927
        %v1026 = vpop.f32.mrf.mxu0
        %v1027 = vadd.f32 0.0, %v1026
        %v1028 = vpop.f32.mrf.mxu0
        %1029 = vmatprep.mubr.f32.mxu0 0.0
        %1030 = vmatmul.mubr.f32.gmra.mxu0 %v930
        %v1031 = vpop.f32.mrf.mxu0
        %v1032 = vadd.f32 0.0, %v1031
        %v1033 = vpop.f32.mrf.mxu0
        %1034 = vmatprep.mubr.f32.mxu0 0.0
        %1035 = vmatmul.mubr.f32.gmra.mxu0 %v933
        %v1036 = vpop.f32.mrf.mxu0
        %v1037 = vadd.f32 0.0, %v1036
        %v1038 = vpop.f32.mrf.mxu0
        %1039 = vdwg.mxu0
        %v1040 = vld [vmem:[%s498] sm:$0x1]
        %v1041 = vpack.c.bf16 %v1007, %v1002
        %v1042 = vld [vmem:[%s495] sm:$0xf]
        %v1044 = vsel %vm628, %v1041, 0
        %vm1046 = vcmask 1043456
        %v1048 = vsel %vm1046, %v1042, 0
        %1050 = vmatprep.subr.bf16.mxu0 0
        %1051 = vmatpush1.bf16.msra.mxu0 0
        %1052 = vmatprep.subr.bf16.mxu0 0
        %1053 = vmatpush1.bf16.msra.mxu0 0
        %1054 = vmatprep.subr.bf16.mxu0 0
        %1055 = vmatpush1.bf16.msra.mxu0 0
        %1056 = vmatprep.subr.bf16.mxu0 0
        %1057 = vmatpush1.bf16.msra.mxu0 0
        %1058 = vmatprep.subr.bf16.mxu0 0
        %1059 = vmatpush1.bf16.msra.mxu0 0
        %1060 = vmatprep.subr.bf16.mxu0 0
        %1061 = vmatpush1.bf16.msra.mxu0 0
        %1062 = vmatprep.subr.bf16.mxu0 0
        %1063 = vmatpush1.bf16.msra.mxu0 0
        %1064 = vmatprep.subr.bf16.mxu0 0
        %1065 = vmatpush1.bf16.msra.mxu0 %v1048
        %1066 = vmatprep.subr.bf16.mxu0 0
        %1067 = vmatpush2.bf16.msra.mxu0 0
        %1068 = vmatprep.subr.bf16.mxu0 0
        %1069 = vmatpush2.bf16.msra.mxu0 0
        %1070 = vmatprep.subr.bf16.mxu0 0
        %1071 = vmatpush2.bf16.msra.mxu0 0
        %1072 = vmatprep.subr.bf16.mxu0 0
        %1073 = vmatpush2.bf16.msra.mxu0 0
        %1074 = vmatprep.subr.bf16.mxu0 0
        %1075 = vmatpush2.bf16.msra.mxu0 0
        %1076 = vmatprep.subr.bf16.mxu0 0
        %1077 = vmatpush2.bf16.msra.mxu0 0
        %1078 = vmatprep.subr.bf16.mxu0 0
        %1079 = vmatpush2.bf16.msra.mxu0 0
        %1080 = vmatprep.subr.bf16.mxu0 0
        %1081 = vmatpush2.bf16.msra.mxu0 0
        %1082 = vmatprep.mubr.bf16.mxu0 0
        %1083 = vmatmul.mubr.bf16.gmra.mxu0 %v1044
        %v1084 = vpop.f32.mrf.mxu0
        %v1085 = vadd.f32 0.0, %v1084
        %v1086 = vpop.f32.mrf.mxu0
        %v1087 = vpop.f32.mrf.mxu0
        %v1088 = vadd.f32 0.0, %v1087
        %v1089 = vpop.f32.mrf.mxu0
        %1090 = vdwg.mxu0
        %v1092 = vlaneseq
        %v1093 = vshrl.u32 %v1092, 7
        %v1094 = vsub.s32 0, %v1093
        %v1095 = vrot.slane %v1040, %v1094
        %v1097 = vadd.f32 %v1095, %v1085
        %v1098 = vadd.f32 %v1095, %v1088
        %v1099 = vpack.c.bf16 %v1017, %v1012
        %s1100 = scalar_lea.vmem %s495, 4
        %v1101 = vld [vmem:[%s1100] sm:$0xf]
        %v1103 = vsel %vm628, %v1099, 0
        %v1106 = vsel %vm1046, %v1101, 0
        %1108 = vmatprep.subr.bf16.mxu0 0
        %1109 = vmatpush1.bf16.msra.mxu0 0
        %1110 = vmatprep.subr.bf16.mxu0 0
        %1111 = vmatpush1.bf16.msra.mxu0 0
        %1112 = vmatprep.subr.bf16.mxu0 0
        %1113 = vmatpush1.bf16.msra.mxu0 0
        %1114 = vmatprep.subr.bf16.mxu0 0
        %1115 = vmatpush1.bf16.msra.mxu0 0
        %1116 = vmatprep.subr.bf16.mxu0 0
        %1117 = vmatpush1.bf16.msra.mxu0 0
        %1118 = vmatprep.subr.bf16.mxu0 0
        %1119 = vmatpush1.bf16.msra.mxu0 0
        %1120 = vmatprep.subr.bf16.mxu0 0
        %1121 = vmatpush1.bf16.msra.mxu0 0
        %1122 = vmatprep.subr.bf16.mxu0 0
        %1123 = vmatpush1.bf16.msra.mxu0 %v1106
        %1124 = vmatprep.subr.bf16.mxu0 0
        %1125 = vmatpush2.bf16.msra.mxu0 0
        %1126 = vmatprep.subr.bf16.mxu0 0
        %1127 = vmatpush2.bf16.msra.mxu0 0
        %1128 = vmatprep.subr.bf16.mxu0 0
        %1129 = vmatpush2.bf16.msra.mxu0 0
        %1130 = vmatprep.subr.bf16.mxu0 0
        %1131 = vmatpush2.bf16.msra.mxu0 0
        %1132 = vmatprep.subr.bf16.mxu0 0
        %1133 = vmatpush2.bf16.msra.mxu0 0
        %1134 = vmatprep.subr.bf16.mxu0 0
        %1135 = vmatpush2.bf16.msra.mxu0 0
        %1136 = vmatprep.subr.bf16.mxu0 0
        %1137 = vmatpush2.bf16.msra.mxu0 0
        %1138 = vmatprep.subr.bf16.mxu0 0
        %1139 = vmatpush2.bf16.msra.mxu0 0
        %1140 = vmatprep.mubr.bf16.mxu0 0
        %1141 = vmatmul.mubr.bf16.gmra.mxu0 %v1103
        %v1142 = vpop.f32.mrf.mxu0
        %v1143 = vadd.f32 0.0, %v1142
        %v1144 = vpop.f32.mrf.mxu0
        %v1145 = vpop.f32.mrf.mxu0
        %v1146 = vadd.f32 0.0, %v1145
        %v1147 = vpop.f32.mrf.mxu0
        %1148 = vdwg.mxu0
        %v1149 = vadd.f32 %v1097, %v1143
        %v1150 = vadd.f32 %v1098, %v1146
        %v1151 = vpack.c.bf16 %v1027, %v1022
        %s1152 = scalar_lea.vmem %s495, 8
        %v1153 = vld [vmem:[%s1152] sm:$0xf]
        %v1155 = vsel %vm628, %v1151, 0
        %v1158 = vsel %vm1046, %v1153, 0
        %1160 = vmatprep.subr.bf16.mxu0 0
        %1161 = vmatpush1.bf16.msra.mxu0 0
        %1162 = vmatprep.subr.bf16.mxu0 0
        %1163 = vmatpush1.bf16.msra.mxu0 0
        %1164 = vmatprep.subr.bf16.mxu0 0
        %1165 = vmatpush1.bf16.msra.mxu0 0
        %1166 = vmatprep.subr.bf16.mxu0 0
        %1167 = vmatpush1.bf16.msra.mxu0 0
        %1168 = vmatprep.subr.bf16.mxu0 0
        %1169 = vmatpush1.bf16.msra.mxu0 0
        %1170 = vmatprep.subr.bf16.mxu0 0
        %1171 = vmatpush1.bf16.msra.mxu0 0
        %1172 = vmatprep.subr.bf16.mxu0 0
        %1173 = vmatpush1.bf16.msra.mxu0 0
        %1174 = vmatprep.subr.bf16.mxu0 0
        %1175 = vmatpush1.bf16.msra.mxu0 %v1158
        %1176 = vmatprep.subr.bf16.mxu0 0
        %1177 = vmatpush2.bf16.msra.mxu0 0
        %1178 = vmatprep.subr.bf16.mxu0 0
        %1179 = vmatpush2.bf16.msra.mxu0 0
        %1180 = vmatprep.subr.bf16.mxu0 0
        %1181 = vmatpush2.bf16.msra.mxu0 0
        %1182 = vmatprep.subr.bf16.mxu0 0
        %1183 = vmatpush2.bf16.msra.mxu0 0
        %1184 = vmatprep.subr.bf16.mxu0 0
        %1185 = vmatpush2.bf16.msra.mxu0 0
        %1186 = vmatprep.subr.bf16.mxu0 0
        %1187 = vmatpush2.bf16.msra.mxu0 0
        %1188 = vmatprep.subr.bf16.mxu0 0
        %1189 = vmatpush2.bf16.msra.mxu0 0
        %1190 = vmatprep.subr.bf16.mxu0 0
        %1191 = vmatpush2.bf16.msra.mxu0 0
        %1192 = vmatprep.mubr.bf16.mxu0 0
        %1193 = vmatmul.mubr.bf16.gmra.mxu0 %v1155
        %v1194 = vpop.f32.mrf.mxu0
        %v1195 = vadd.f32 0.0, %v1194
        %v1196 = vpop.f32.mrf.mxu0
        %v1197 = vpop.f32.mrf.mxu0
        %v1198 = vadd.f32 0.0, %v1197
        %v1199 = vpop.f32.mrf.mxu0
        %1200 = vdwg.mxu0
        %v1201 = vadd.f32 %v1149, %v1195
        %v1202 = vadd.f32 %v1150, %v1198
        %v1203 = vpack.c.bf16 %v1037, %v1032
        %s1204 = scalar_lea.vmem %s495, 12
        %v1205 = vld [vmem:[%s1204] sm:$0xf]
        %v1207 = vsel %vm628, %v1203, 0
        %v1210 = vsel %vm1046, %v1205, 0
        %1212 = vmatprep.subr.bf16.mxu0 0
        %1213 = vmatpush1.bf16.msra.mxu0 0
        %1214 = vmatprep.subr.bf16.mxu0 0
        %1215 = vmatpush1.bf16.msra.mxu0 0
        %1216 = vmatprep.subr.bf16.mxu0 0
        %1217 = vmatpush1.bf16.msra.mxu0 0
        %1218 = vmatprep.subr.bf16.mxu0 0
        %1219 = vmatpush1.bf16.msra.mxu0 0
        %1220 = vmatprep.subr.bf16.mxu0 0
        %1221 = vmatpush1.bf16.msra.mxu0 0
        %1222 = vmatprep.subr.bf16.mxu0 0
        %1223 = vmatpush1.bf16.msra.mxu0 0
        %1224 = vmatprep.subr.bf16.mxu0 0
        %1225 = vmatpush1.bf16.msra.mxu0 0
        %1226 = vmatprep.subr.bf16.mxu0 0
        %1227 = vmatpush1.bf16.msra.mxu0 %v1210
        %1228 = vmatprep.subr.bf16.mxu0 0
        %1229 = vmatpush2.bf16.msra.mxu0 0
        %1230 = vmatprep.subr.bf16.mxu0 0
        %1231 = vmatpush2.bf16.msra.mxu0 0
        %1232 = vmatprep.subr.bf16.mxu0 0
        %1233 = vmatpush2.bf16.msra.mxu0 0
        %1234 = vmatprep.subr.bf16.mxu0 0
        %1235 = vmatpush2.bf16.msra.mxu0 0
        %1236 = vmatprep.subr.bf16.mxu0 0
        %1237 = vmatpush2.bf16.msra.mxu0 0
        %1238 = vmatprep.subr.bf16.mxu0 0
        %1239 = vmatpush2.bf16.msra.mxu0 0
        %1240 = vmatprep.subr.bf16.mxu0 0
        %1241 = vmatpush2.bf16.msra.mxu0 0
        %1242 = vmatprep.subr.bf16.mxu0 0
        %1243 = vmatpush2.bf16.msra.mxu0 0
        %1244 = vmatprep.mubr.bf16.mxu0 0
        %1245 = vmatmul.mubr.bf16.gmra.mxu0 %v1207
        %v1246 = vpop.f32.mrf.mxu0
        %v1247 = vadd.f32 0.0, %v1246
        %v1248 = vpop.f32.mrf.mxu0
        %v1249 = vpop.f32.mrf.mxu0
        %v1250 = vadd.f32 0.0, %v1249
        %v1251 = vpop.f32.mrf.mxu0
        %1252 = vdwg.mxu0
        %v1253 = vadd.f32 %v1201, %v1247
        %v1254 = vadd.f32 %v1202, %v1250
        %v1255 = vld [vmem:[%s503] sm:$0xf]
        %v1256 = vld [vmem:[%s503 + $0x4] sm:$0xf]
        %v1257 = vld [vmem:[%s503 + $0x8] sm:$0xf]
        %v1258 = vld [vmem:[%s503 + $0xc] sm:$0xf]
        %v1259 = vpack.c.bf16 %v1254, %v1253
        %v1260 = vld [vmem:[%s508] sm:$0xf]
        %v1261 = vld [vmem:[%s508 + $0x4] sm:$0xf]
        %v1262 = vld [vmem:[%s508 + $0x8] sm:$0xf]
        %v1263 = vld [vmem:[%s508 + $0xc] sm:$0xf]
        %v1268 = vunpack.c.l.b16 %v1260
        %v1269 = vunpack.c.l.b16 %v1261
        %v1270 = vunpack.c.l.b16 %v1262
        %v1271 = vunpack.c.l.b16 %v1263
        %v1272 = vpack.c.b16 %v1269, %v1268
        %v1273 = vpack.c.b16 %v1271, %v1270
        %v1277 = vsel %vm553, %v1259, 0
        %1279 = vmatprep.subr.bf16.mxu0 0
        %1280 = vmatpush1.bf16.msra.mxu0 0
        %1281 = vmatprep.subr.bf16.mxu0 0
        %1282 = vmatpush1.bf16.msra.mxu0 0
        %1283 = vmatprep.subr.bf16.mxu0 0
        %1284 = vmatpush1.bf16.msra.mxu0 0
        %1285 = vmatprep.subr.bf16.mxu0 0
        %1286 = vmatpush1.bf16.msra.mxu0 0
        %1287 = vmatprep.subr.bf16.mxu0 0
        %1288 = vmatpush1.bf16.msra.mxu0 0
        %1289 = vmatprep.subr.bf16.mxu0 0
        %1290 = vmatpush1.bf16.msra.mxu0 0
        %1291 = vmatprep.subr.bf16.mxu0 0
        %1292 = vmatpush1.bf16.msra.mxu0 %v1273
        %1293 = vmatprep.subr.bf16.mxu0 0
        %1294 = vmatpush1.bf16.msra.mxu0 %v1272
        %1295 = vmatprep.subr.bf16.mxu0 0
        %1296 = vmatpush2.bf16.msra.mxu0 0
        %1297 = vmatprep.subr.bf16.mxu0 0
        %1298 = vmatpush2.bf16.msra.mxu0 0
        %1299 = vmatprep.subr.bf16.mxu0 0
        %1300 = vmatpush2.bf16.msra.mxu0 0
        %1301 = vmatprep.subr.bf16.mxu0 0
        %1302 = vmatpush2.bf16.msra.mxu0 0
        %1303 = vmatprep.subr.bf16.mxu0 0
        %1304 = vmatpush2.bf16.msra.mxu0 0
        %1305 = vmatprep.subr.bf16.mxu0 0
        %1306 = vmatpush2.bf16.msra.mxu0 0
        %1307 = vmatprep.subr.bf16.mxu0 0
        %1308 = vmatpush2.bf16.msra.mxu0 0
        %1309 = vmatprep.subr.bf16.mxu0 0
        %1310 = vmatpush2.bf16.msra.mxu0 0
        %1311 = vmatprep.mubr.bf16.mxu0 0
        %1312 = vmatmul.mubr.bf16.gmra.mxu0 %v1277
        %v1313 = vpop.f32.mrf.mxu0
        %v1314 = vadd.f32 0.0, %v1313
        %v1315 = vpop.f32.mrf.mxu0
        %v1316 = vpop.f32.mrf.mxu0
        %v1317 = vadd.f32 0.0, %v1316
        %v1318 = vpop.f32.mrf.mxu0
        %1319 = vdwg.mxu0
        %v1324 = vunpack.c.l.b16 %v1255
        %v1325 = vunpack.c.l.b16 %v1256
        %v1326 = vunpack.c.l.b16 %v1257
        %v1327 = vunpack.c.l.b16 %v1258
        %v1328 = vpack.c.b16 %v1325, %v1324
        %v1329 = vpack.c.b16 %v1327, %v1326
        %1332 = vmatprep.subr.bf16.mxu0 0
        %1333 = vmatpush1.bf16.msra.mxu0 0
        %1334 = vmatprep.subr.bf16.mxu0 0
        %1335 = vmatpush1.bf16.msra.mxu0 0
        %1336 = vmatprep.subr.bf16.mxu0 0
        %1337 = vmatpush1.bf16.msra.mxu0 0
        %1338 = vmatprep.subr.bf16.mxu0 0
        %1339 = vmatpush1.bf16.msra.mxu0 0
        %1340 = vmatprep.subr.bf16.mxu0 0
        %1341 = vmatpush1.bf16.msra.mxu0 0
        %1342 = vmatprep.subr.bf16.mxu0 0
        %1343 = vmatpush1.bf16.msra.mxu0 0
        %1344 = vmatprep.subr.bf16.mxu0 0
        %1345 = vmatpush1.bf16.msra.mxu0 %v1329
        %1346 = vmatprep.subr.bf16.mxu0 0
        %1347 = vmatpush1.bf16.msra.mxu0 %v1328
        %1348 = vmatprep.subr.bf16.mxu0 0
        %1349 = vmatpush2.bf16.msra.mxu0 0
        %1350 = vmatprep.subr.bf16.mxu0 0
        %1351 = vmatpush2.bf16.msra.mxu0 0
        %1352 = vmatprep.subr.bf16.mxu0 0
        %1353 = vmatpush2.bf16.msra.mxu0 0
        %1354 = vmatprep.subr.bf16.mxu0 0
        %1355 = vmatpush2.bf16.msra.mxu0 0
        %1356 = vmatprep.subr.bf16.mxu0 0
        %1357 = vmatpush2.bf16.msra.mxu0 0
        %1358 = vmatprep.subr.bf16.mxu0 0
        %1359 = vmatpush2.bf16.msra.mxu0 0
        %1360 = vmatprep.subr.bf16.mxu0 0
        %1361 = vmatpush2.bf16.msra.mxu0 0
        %1362 = vmatprep.subr.bf16.mxu0 0
        %1363 = vmatpush2.bf16.msra.mxu0 0
        %1364 = vmatprep.mubr.bf16.mxu0 0
        %1365 = vmatmul.mubr.bf16.gmra.mxu0 %v555
        %v1366 = vpop.f32.mrf.mxu0
        %v1367 = vadd.f32 %v1314, %v1366
        %v1368 = vpop.f32.mrf.mxu0
        %v1369 = vpop.f32.mrf.mxu0
        %v1370 = vadd.f32 %v1317, %v1369
        %v1371 = vpop.f32.mrf.mxu0
        %1372 = vdwg.mxu0
        %v1373 = vld [vmem:[%s516] sm:$0x1]
        %v1375 = vlaneseq
        %v1376 = vshrl.u32 %v1375, 7
        %v1377 = vsub.s32 0, %v1376
        %v1378 = vrot.slane %v1373, %v1377
        %v1380 = vadd.f32 %v1367, %v1378
        %v1381 = vadd.f32 %v1370, %v1378
        %v1382 = vld [vmem:[%s513] sm:$0xf]
        %v1383 = vld [vmem:[%s513 + $0x4] sm:$0xf]
        %v1384 = vld [vmem:[%s513 + $0x8] sm:$0xf]
        %v1385 = vld [vmem:[%s513 + $0xc] sm:$0xf]
        %v1390 = vunpack.c.l.b16 %v1382
        %v1391 = vunpack.c.l.b16 %v1383
        %v1392 = vunpack.c.l.b16 %v1384
        %v1393 = vunpack.c.l.b16 %v1385
        %v1394 = vpack.c.b16 %v1391, %v1390
        %v1395 = vpack.c.b16 %v1393, %v1392
        %v1399 = vsel %vm553, 0, 0
        %1401 = vmatprep.subr.bf16.mxu0 0
        %1402 = vmatpush1.bf16.msra.mxu0 0
        %1403 = vmatprep.subr.bf16.mxu0 0
        %1404 = vmatpush1.bf16.msra.mxu0 0
        %1405 = vmatprep.subr.bf16.mxu0 0
        %1406 = vmatpush1.bf16.msra.mxu0 0
        %1407 = vmatprep.subr.bf16.mxu0 0
        %1408 = vmatpush1.bf16.msra.mxu0 0
        %1409 = vmatprep.subr.bf16.mxu0 0
        %1410 = vmatpush1.bf16.msra.mxu0 0
        %1411 = vmatprep.subr.bf16.mxu0 0
        %1412 = vmatpush1.bf16.msra.mxu0 0
        %1413 = vmatprep.subr.bf16.mxu0 0
        %1414 = vmatpush1.bf16.msra.mxu0 %v1395
        %1415 = vmatprep.subr.bf16.mxu0 0
        %1416 = vmatpush1.bf16.msra.mxu0 %v1394
        %1417 = vmatprep.subr.bf16.mxu0 0
        %1418 = vmatpush2.bf16.msra.mxu0 0
        %1419 = vmatprep.subr.bf16.mxu0 0
        %1420 = vmatpush2.bf16.msra.mxu0 0
        %1421 = vmatprep.subr.bf16.mxu0 0
        %1422 = vmatpush2.bf16.msra.mxu0 0
        %1423 = vmatprep.subr.bf16.mxu0 0
        %1424 = vmatpush2.bf16.msra.mxu0 0
        %1425 = vmatprep.subr.bf16.mxu0 0
        %1426 = vmatpush2.bf16.msra.mxu0 0
        %1427 = vmatprep.subr.bf16.mxu0 0
        %1428 = vmatpush2.bf16.msra.mxu0 0
        %1429 = vmatprep.subr.bf16.mxu0 0
        %1430 = vmatpush2.bf16.msra.mxu0 0
        %1431 = vmatprep.subr.bf16.mxu0 0
        %1432 = vmatpush2.bf16.msra.mxu0 0
        %1433 = vmatprep.mubr.bf16.mxu0 0
        %1434 = vmatmul.mubr.bf16.gmra.mxu0 %v1399
        %v1435 = vpop.f32.mrf.mxu0
        %v1436 = vadd.f32 0.0, %v1435
        %v1437 = vpop.f32.mrf.mxu0
        %v1438 = vpop.f32.mrf.mxu0
        %v1439 = vpop.f32.mrf.mxu0
        %1440 = vdwg.mxu0
        %v1441 = vadd.f32 %v1380, %v1436
        %v1442 = vxor.u32 %v1441, 2147483648
        %v1443 = vmul.f32 %v1442, 1.442695
        %v1444 = vpow.pop %v1443
        %v1445 = vadd.f32 %v1444, 1.0
        %v1446 = vrcp.pop %v1445
        %v1447 = vmul.f32 1.0, %v1446
        %v1448 = vtanh.pop %v1441
        %v1449 = vmul.f32 %v1447, 0.0
        %1451 = vrot.lane.b32.xlu0 %v1448, 64
        %v1452 = vpop.permute.xlu0 %1451
        %v1454 = vmul.f32 %v1447, %v1452
        %1456 = vrot.lane.b32.xlu0 %v1454, 32
        %v1457 = vpop.permute.xlu0 %1456
        %v1459 = vadd.f32 %v1449, %v1457
        %v1460 = vtanh.pop %v1459
        %1462 = vrot.lane.b32.xlu0 %v1460, 64
        %v1463 = vpop.permute.xlu0 %1462
        %v1465 = vmul.f32 %v1447, %v1463
        %1467 = vrot.lane.b32.xlu0 %v1465, 32
        %v1468 = vpop.permute.xlu0 %1467
        %vm1470 = vcmask 254976
        %1471 = vst.msk [vmem:[#allocation2] sm:$0x3] %vm1470, %v1468
        %v1472 = vpack.c.bf16 %v1465, %v1465
        %1474 = vrot.lane.b32.xlu0 %v1472, 32
        %v1475 = vpop.permute.xlu0 %1474
        %v1477 = vsel %vm553, %v1475, 0
        %1479 = vmatprep.subr.bf16.mxu0 0
        %1480 = vmatpush1.bf16.msra.mxu0 0
        %1481 = vmatprep.subr.bf16.mxu0 0
        %1482 = vmatpush1.bf16.msra.mxu0 0
        %1483 = vmatprep.subr.bf16.mxu0 0
        %1484 = vmatpush1.bf16.msra.mxu0 0
        %1485 = vmatprep.subr.bf16.mxu0 0
        %1486 = vmatpush1.bf16.msra.mxu0 0
        %1487 = vmatprep.subr.bf16.mxu0 0
        %1488 = vmatpush1.bf16.msra.mxu0 0
        %1489 = vmatprep.subr.bf16.mxu0 0
        %1490 = vmatpush1.bf16.msra.mxu0 0
        %1491 = vmatprep.subr.bf16.mxu0 0
        %1492 = vmatpush1.bf16.msra.mxu0 %v1395
        %1493 = vmatprep.subr.bf16.mxu0 0
        %1494 = vmatpush1.bf16.msra.mxu0 %v1394
        %1495 = vmatprep.subr.bf16.mxu0 0
        %1496 = vmatpush2.bf16.msra.mxu0 0
        %1497 = vmatprep.subr.bf16.mxu0 0
        %1498 = vmatpush2.bf16.msra.mxu0 0
        %1499 = vmatprep.subr.bf16.mxu0 0
        %1500 = vmatpush2.bf16.msra.mxu0 0
        %1501 = vmatprep.subr.bf16.mxu0 0
        %1502 = vmatpush2.bf16.msra.mxu0 0
        %1503 = vmatprep.subr.bf16.mxu0 0
        %1504 = vmatpush2.bf16.msra.mxu0 0
        %1505 = vmatprep.subr.bf16.mxu0 0
        %1506 = vmatpush2.bf16.msra.mxu0 0
        %1507 = vmatprep.subr.bf16.mxu0 0
        %1508 = vmatpush2.bf16.msra.mxu0 0
        %1509 = vmatprep.subr.bf16.mxu0 0
        %1510 = vmatpush2.bf16.msra.mxu0 0
        %1511 = vmatprep.mubr.bf16.mxu0 0
        %1512 = vmatmul.mubr.bf16.gmra.mxu0 %v1477
        %v1513 = vpop.f32.mrf.mxu0
        %v1514 = vadd.f32 0.0, %v1513
        %v1515 = vpop.f32.mrf.mxu0
        %v1516 = vpop.f32.mrf.mxu0
        %v1517 = vpop.f32.mrf.mxu0
        %1518 = vdwg.mxu0
        %v1520 = vrot.slane %v1514, 6
        %v1522 = vadd.f32 %v1380, %v1520
        %v1523 = vxor.u32 %v1522, 2147483648
        %v1524 = vmul.f32 %v1523, 1.442695
        %v1525 = vpow.pop %v1524
        %v1526 = vadd.f32 %v1525, 1.0
        %v1527 = vrcp.pop %v1526
        %v1528 = vmul.f32 1.0, %v1527
        %v1529 = vtanh.pop %v1522
        %v1531 = vrot.slane %v1459, 6
        %v1533 = vmul.f32 %v1528, %v1531
        %1535 = vrot.lane.b32.xlu0 %v1529, 64
        %v1536 = vpop.permute.xlu0 %1535
        %v1538 = vmul.f32 %v1528, %v1536
        %1540 = vrot.lane.b32.xlu0 %v1538, 32
        %v1541 = vpop.permute.xlu0 %1540
        %v1543 = vadd.f32 %v1533, %v1541
        %v1544 = vtanh.pop %v1543
        %1546 = vrot.lane.b32.xlu0 %v1544, 64
        %v1547 = vpop.permute.xlu0 %1546
        %v1549 = vmul.f32 %v1528, %v1547
        %1551 = vrot.lane.b32.xlu0 %v1549, 32
        %v1552 = vpop.permute.xlu0 %1551
        %vm1554 = vcmask 257026
        %1555 = vst.msk [vmem:[#allocation2] sm:$0xc] %vm1554, %v1552
        %v1556 = vpack.c.bf16 %v1549, %v1549
        %v1558 = vrot.slane %v1556, 1
        %1559 = vrot.lane.b32.xlu0 %v1558, 32
        %v1560 = vpop.permute.xlu0 %1559
        %v1562 = vsel %vm553, %v1560, 0
        %1564 = vmatprep.subr.bf16.mxu0 0
        %1565 = vmatpush1.bf16.msra.mxu0 0
        %1566 = vmatprep.subr.bf16.mxu0 0
        %1567 = vmatpush1.bf16.msra.mxu0 0
        %1568 = vmatprep.subr.bf16.mxu0 0
        %1569 = vmatpush1.bf16.msra.mxu0 0
        %1570 = vmatprep.subr.bf16.mxu0 0
        %1571 = vmatpush1.bf16.msra.mxu0 0
        %1572 = vmatprep.subr.bf16.mxu0 0
        %1573 = vmatpush1.bf16.msra.mxu0 0
        %1574 = vmatprep.subr.bf16.mxu0 0
        %1575 = vmatpush1.bf16.msra.mxu0 0
        %1576 = vmatprep.subr.bf16.mxu0 0
        %1577 = vmatpush1.bf16.msra.mxu0 %v1395
        %1578 = vmatprep.subr.bf16.mxu0 0
        %1579 = vmatpush1.bf16.msra.mxu0 %v1394
        %1580 = vmatprep.subr.bf16.mxu0 0
        %1581 = vmatpush2.bf16.msra.mxu0 0
        %1582 = vmatprep.subr.bf16.mxu0 0
        %1583 = vmatpush2.bf16.msra.mxu0 0
        %1584 = vmatprep.subr.bf16.mxu0 0
        %1585 = vmatpush2.bf16.msra.mxu0 0
        %1586 = vmatprep.subr.bf16.mxu0 0
        %1587 = vmatpush2.bf16.msra.mxu0 0
        %1588 = vmatprep.subr.bf16.mxu0 0
        %1589 = vmatpush2.bf16.msra.mxu0 0
        %1590 = vmatprep.subr.bf16.mxu0 0
        %1591 = vmatpush2.bf16.msra.mxu0 0
        %1592 = vmatprep.subr.bf16.mxu0 0
        %1593 = vmatpush2.bf16.msra.mxu0 0
        %1594 = vmatprep.subr.bf16.mxu0 0
        %1595 = vmatpush2.bf16.msra.mxu0 0
        %1596 = vmatprep.mubr.bf16.mxu0 0
        %1597 = vmatmul.mubr.bf16.gmra.mxu0 %v1562
        %v1598 = vpop.f32.mrf.mxu0
        %v1599 = vadd.f32 0.0, %v1598
        %v1600 = vpop.f32.mrf.mxu0
        %v1601 = vpop.f32.mrf.mxu0
        %v1602 = vpop.f32.mrf.mxu0
        %1603 = vdwg.mxu0
        %v1605 = vrot.slane %v1599, 4
        %v1607 = vadd.f32 %v1380, %v1605
        %v1608 = vxor.u32 %v1607, 2147483648
        %v1609 = vmul.f32 %v1608, 1.442695
        %v1610 = vpow.pop %v1609
        %v1611 = vadd.f32 %v1610, 1.0
        %v1612 = vrcp.pop %v1611
        %v1613 = vmul.f32 1.0, %v1612
        %v1614 = vtanh.pop %v1607
        %v1616 = vrot.slane %v1543, 6
        %v1618 = vmul.f32 %v1613, %v1616
        %1620 = vrot.lane.b32.xlu0 %v1614, 64
        %v1621 = vpop.permute.xlu0 %1620
        %v1623 = vmul.f32 %v1613, %v1621
        %1625 = vrot.lane.b32.xlu0 %v1623, 32
        %v1626 = vpop.permute.xlu0 %1625
        %v1628 = vadd.f32 %v1618, %v1626
        %v1629 = vtanh.pop %v1628
        %1631 = vrot.lane.b32.xlu0 %v1629, 64
        %v1632 = vpop.permute.xlu0 %1631
        %v1634 = vmul.f32 %v1613, %v1632
        %1636 = vrot.lane.b32.xlu0 %v1634, 32
        %v1637 = vpop.permute.xlu0 %1636
        %vm1639 = vcmask 259076
        %1640 = vst.msk [vmem:[#allocation2] sm:$0x30] %vm1639, %v1637
        %v1641 = vpack.c.bf16 %v1634, %v1634
        %v1643 = vrot.slane %v1641, 2
        %1644 = vrot.lane.b32.xlu0 %v1643, 32
        %v1645 = vpop.permute.xlu0 %1644
        %v1647 = vsel %vm553, %v1645, 0
        %1649 = vmatprep.subr.bf16.mxu0 0
        %1650 = vmatpush1.bf16.msra.mxu0 0
        %1651 = vmatprep.subr.bf16.mxu0 0
        %1652 = vmatpush1.bf16.msra.mxu0 0
        %1653 = vmatprep.subr.bf16.mxu0 0
        %1654 = vmatpush1.bf16.msra.mxu0 0
        %1655 = vmatprep.subr.bf16.mxu0 0
        %1656 = vmatpush1.bf16.msra.mxu0 0
        %1657 = vmatprep.subr.bf16.mxu0 0
        %1658 = vmatpush1.bf16.msra.mxu0 0
        %1659 = vmatprep.subr.bf16.mxu0 0
        %1660 = vmatpush1.bf16.msra.mxu0 0
        %1661 = vmatprep.subr.bf16.mxu0 0
        %1662 = vmatpush1.bf16.msra.mxu0 %v1395
        %1663 = vmatprep.subr.bf16.mxu0 0
        %1664 = vmatpush1.bf16.msra.mxu0 %v1394
        %1665 = vmatprep.subr.bf16.mxu0 0
        %1666 = vmatpush2.bf16.msra.mxu0 0
        %1667 = vmatprep.subr.bf16.mxu0 0
        %1668 = vmatpush2.bf16.msra.mxu0 0
        %1669 = vmatprep.subr.bf16.mxu0 0
        %1670 = vmatpush2.bf16.msra.mxu0 0
        %1671 = vmatprep.subr.bf16.mxu0 0
        %1672 = vmatpush2.bf16.msra.mxu0 0
        %1673 = vmatprep.subr.bf16.mxu0 0
        %1674 = vmatpush2.bf16.msra.mxu0 0
        %1675 = vmatprep.subr.bf16.mxu0 0
        %1676 = vmatpush2.bf16.msra.mxu0 0
        %1677 = vmatprep.subr.bf16.mxu0 0
        %1678 = vmatpush2.bf16.msra.mxu0 0
        %1679 = vmatprep.subr.bf16.mxu0 0
        %1680 = vmatpush2.bf16.msra.mxu0 0
        %1681 = vmatprep.mubr.bf16.mxu0 0
        %1682 = vmatmul.mubr.bf16.gmra.mxu0 %v1647
        %v1683 = vpop.f32.mrf.mxu0
        %v1684 = vadd.f32 0.0, %v1683
        %v1685 = vpop.f32.mrf.mxu0
        %v1686 = vpop.f32.mrf.mxu0
        %v1687 = vpop.f32.mrf.mxu0
        %1688 = vdwg.mxu0
        %v1690 = vrot.slane %v1684, 2
        %v1692 = vadd.f32 %v1380, %v1690
        %v1693 = vxor.u32 %v1692, 2147483648
        %v1694 = vmul.f32 %v1693, 1.442695
        %v1695 = vpow.pop %v1694
        %v1696 = vadd.f32 %v1695, 1.0
        %v1697 = vrcp.pop %v1696
        %v1698 = vmul.f32 1.0, %v1697
        %v1699 = vtanh.pop %v1692
        %v1701 = vrot.slane %v1628, 6
        %v1703 = vmul.f32 %v1698, %v1701
        %1705 = vrot.lane.b32.xlu0 %v1699, 64
        %v1706 = vpop.permute.xlu0 %1705
        %v1708 = vmul.f32 %v1698, %v1706
        %1710 = vrot.lane.b32.xlu0 %v1708, 32
        %v1711 = vpop.permute.xlu0 %1710
        %v1713 = vadd.f32 %v1703, %v1711
        %v1714 = vtanh.pop %v1713
        %1716 = vrot.lane.b32.xlu0 %v1714, 64
        %v1717 = vpop.permute.xlu0 %1716
        %v1719 = vmul.f32 %v1698, %v1717
        %1721 = vrot.lane.b32.xlu0 %v1719, 32
        %v1722 = vpop.permute.xlu0 %1721
        %vm1724 = vcmask 261126
        %1725 = vst.msk [vmem:[#allocation2] sm:$0xc0] %vm1724, %v1722
        %v1726 = vpack.c.bf16 %v1719, %v1719
        %v1728 = vrot.slane %v1726, 3
        %1729 = vrot.lane.b32.xlu0 %v1728, 32
        %v1730 = vpop.permute.xlu0 %1729
        %v1732 = vsel %vm553, %v1730, 0
        %1734 = vmatprep.subr.bf16.mxu0 0
        %1735 = vmatpush1.bf16.msra.mxu0 0
        %1736 = vmatprep.subr.bf16.mxu0 0
        %1737 = vmatpush1.bf16.msra.mxu0 0
        %1738 = vmatprep.subr.bf16.mxu0 0
        %1739 = vmatpush1.bf16.msra.mxu0 0
        %1740 = vmatprep.subr.bf16.mxu0 0
        %1741 = vmatpush1.bf16.msra.mxu0 0
        %1742 = vmatprep.subr.bf16.mxu0 0
        %1743 = vmatpush1.bf16.msra.mxu0 0
        %1744 = vmatprep.subr.bf16.mxu0 0
        %1745 = vmatpush1.bf16.msra.mxu0 0
        %1746 = vmatprep.subr.bf16.mxu0 0
        %1747 = vmatpush1.bf16.msra.mxu0 %v1395
        %1748 = vmatprep.subr.bf16.mxu0 0
        %1749 = vmatpush1.bf16.msra.mxu0 %v1394
        %1750 = vmatprep.subr.bf16.mxu0 0
        %1751 = vmatpush2.bf16.msra.mxu0 0
        %1752 = vmatprep.subr.bf16.mxu0 0
        %1753 = vmatpush2.bf16.msra.mxu0 0
        %1754 = vmatprep.subr.bf16.mxu0 0
        %1755 = vmatpush2.bf16.msra.mxu0 0
        %1756 = vmatprep.subr.bf16.mxu0 0
        %1757 = vmatpush2.bf16.msra.mxu0 0
        %1758 = vmatprep.subr.bf16.mxu0 0
        %1759 = vmatpush2.bf16.msra.mxu0 0
        %1760 = vmatprep.subr.bf16.mxu0 0
        %1761 = vmatpush2.bf16.msra.mxu0 0
        %1762 = vmatprep.subr.bf16.mxu0 0
        %1763 = vmatpush2.bf16.msra.mxu0 0
        %1764 = vmatprep.subr.bf16.mxu0 0
        %1765 = vmatpush2.bf16.msra.mxu0 0
        %1766 = vmatprep.mubr.bf16.mxu0 0
        %1767 = vmatmul.mubr.bf16.gmra.mxu0 %v1732
        %v1768 = vpop.f32.mrf.mxu0
        %v1769 = vadd.f32 0.0, %v1768
        %v1770 = vpop.f32.mrf.mxu0
        %v1771 = vpop.f32.mrf.mxu0
        %v1772 = vpop.f32.mrf.mxu0
        %1773 = vdwg.mxu0
        %v1774 = vadd.f32 %v1381, %v1769
        %v1775 = vxor.u32 %v1774, 2147483648
        %v1776 = vmul.f32 %v1775, 1.442695
        %v1777 = vpow.pop %v1776
        %v1778 = vadd.f32 %v1777, 1.0
        %v1779 = vrcp.pop %v1778
        %v1780 = vmul.f32 1.0, %v1779
        %v1781 = vtanh.pop %v1774
        %v1783 = vrot.slane %v1713, 6
        %v1785 = vmul.f32 %v1780, %v1783
        %1787 = vrot.lane.b32.xlu0 %v1781, 64
        %v1788 = vpop.permute.xlu0 %1787
        %v1790 = vmul.f32 %v1780, %v1788
        %1792 = vrot.lane.b32.xlu0 %v1790, 32
        %v1793 = vpop.permute.xlu0 %1792
        %v1795 = vadd.f32 %v1785, %v1793
        %v1796 = vtanh.pop %v1795
        %1798 = vrot.lane.b32.xlu0 %v1796, 64
        %v1799 = vpop.permute.xlu0 %1798
        %v1801 = vmul.f32 %v1780, %v1799
        %1803 = vrot.lane.b32.xlu0 %v1801, 32
        %v1804 = vpop.permute.xlu0 %1803
        %1806 = vst.msk [vmem:[#allocation2 + $0x8] sm:$0x3] %vm1470, %v1804
        %v1807 = vpack.c.bf16 %v1801, %v1801
        %1809 = vrot.lane.b32.xlu0 %v1807, 32
        %v1810 = vpop.permute.xlu0 %1809
        %v1812 = vsel %vm553, %v1810, 0
        %1814 = vmatprep.subr.bf16.mxu0 0
        %1815 = vmatpush1.bf16.msra.mxu0 0
        %1816 = vmatprep.subr.bf16.mxu0 0
        %1817 = vmatpush1.bf16.msra.mxu0 0
        %1818 = vmatprep.subr.bf16.mxu0 0
        %1819 = vmatpush1.bf16.msra.mxu0 0
        %1820 = vmatprep.subr.bf16.mxu0 0
        %1821 = vmatpush1.bf16.msra.mxu0 0
        %1822 = vmatprep.subr.bf16.mxu0 0
        %1823 = vmatpush1.bf16.msra.mxu0 0
        %1824 = vmatprep.subr.bf16.mxu0 0
        %1825 = vmatpush1.bf16.msra.mxu0 0
        %1826 = vmatprep.subr.bf16.mxu0 0
        %1827 = vmatpush1.bf16.msra.mxu0 %v1395
        %1828 = vmatprep.subr.bf16.mxu0 0
        %1829 = vmatpush1.bf16.msra.mxu0 %v1394
        %1830 = vmatprep.subr.bf16.mxu0 0
        %1831 = vmatpush2.bf16.msra.mxu0 0
        %1832 = vmatprep.subr.bf16.mxu0 0
        %1833 = vmatpush2.bf16.msra.mxu0 0
        %1834 = vmatprep.subr.bf16.mxu0 0
        %1835 = vmatpush2.bf16.msra.mxu0 0
        %1836 = vmatprep.subr.bf16.mxu0 0
        %1837 = vmatpush2.bf16.msra.mxu0 0
        %1838 = vmatprep.subr.bf16.mxu0 0
        %1839 = vmatpush2.bf16.msra.mxu0 0
        %1840 = vmatprep.subr.bf16.mxu0 0
        %1841 = vmatpush2.bf16.msra.mxu0 0
        %1842 = vmatprep.subr.bf16.mxu0 0
        %1843 = vmatpush2.bf16.msra.mxu0 0
        %1844 = vmatprep.subr.bf16.mxu0 0
        %1845 = vmatpush2.bf16.msra.mxu0 0
        %1846 = vmatprep.mubr.bf16.mxu0 0
        %1847 = vmatmul.mubr.bf16.gmra.mxu0 %v1812
        %v1848 = vpop.f32.mrf.mxu0
        %v1849 = vadd.f32 0.0, %v1848
        %v1850 = vpop.f32.mrf.mxu0
        %v1851 = vpop.f32.mrf.mxu0
        %v1852 = vpop.f32.mrf.mxu0
        %1853 = vdwg.mxu0
        %v1855 = vrot.slane %v1849, 6
        %v1857 = vadd.f32 %v1381, %v1855
        %v1858 = vxor.u32 %v1857, 2147483648
        %v1859 = vmul.f32 %v1858, 1.442695
        %v1860 = vpow.pop %v1859
        %v1861 = vadd.f32 %v1860, 1.0
        %v1862 = vrcp.pop %v1861
        %v1863 = vmul.f32 1.0, %v1862
        %v1864 = vtanh.pop %v1857
        %v1866 = vrot.slane %v1795, 6
        %v1868 = vmul.f32 %v1863, %v1866
        %1870 = vrot.lane.b32.xlu0 %v1864, 64
        %v1871 = vpop.permute.xlu0 %1870
        %v1873 = vmul.f32 %v1863, %v1871
        %1875 = vrot.lane.b32.xlu0 %v1873, 32
        %v1876 = vpop.permute.xlu0 %1875
        %v1878 = vadd.f32 %v1868, %v1876
        %v1879 = vtanh.pop %v1878
        %1881 = vrot.lane.b32.xlu0 %v1879, 64
        %v1882 = vpop.permute.xlu0 %1881
        %v1884 = vmul.f32 %v1863, %v1882
        %1886 = vrot.lane.b32.xlu0 %v1884, 32
        %v1887 = vpop.permute.xlu0 %1886
        %1889 = vst.msk [vmem:[#allocation2 + $0x8] sm:$0xc] %vm1554, %v1887
        %v1890 = vpack.c.bf16 %v1884, %v1884
        %v1892 = vrot.slane %v1890, 1
        %1893 = vrot.lane.b32.xlu0 %v1892, 32
        %v1894 = vpop.permute.xlu0 %1893
        %v1896 = vsel %vm553, %v1894, 0
        %1898 = vmatprep.subr.bf16.mxu0 0
        %1899 = vmatpush1.bf16.msra.mxu0 0
        %1900 = vmatprep.subr.bf16.mxu0 0
        %1901 = vmatpush1.bf16.msra.mxu0 0
        %1902 = vmatprep.subr.bf16.mxu0 0
        %1903 = vmatpush1.bf16.msra.mxu0 0
        %1904 = vmatprep.subr.bf16.mxu0 0
        %1905 = vmatpush1.bf16.msra.mxu0 0
        %1906 = vmatprep.subr.bf16.mxu0 0
        %1907 = vmatpush1.bf16.msra.mxu0 0
        %1908 = vmatprep.subr.bf16.mxu0 0
        %1909 = vmatpush1.bf16.msra.mxu0 0
        %1910 = vmatprep.subr.bf16.mxu0 0
        %1911 = vmatpush1.bf16.msra.mxu0 %v1395
        %1912 = vmatprep.subr.bf16.mxu0 0
        %1913 = vmatpush1.bf16.msra.mxu0 %v1394
        %1914 = vmatprep.subr.bf16.mxu0 0
        %1915 = vmatpush2.bf16.msra.mxu0 0
        %1916 = vmatprep.subr.bf16.mxu0 0
        %1917 = vmatpush2.bf16.msra.mxu0 0
        %1918 = vmatprep.subr.bf16.mxu0 0
        %1919 = vmatpush2.bf16.msra.mxu0 0
        %1920 = vmatprep.subr.bf16.mxu0 0
        %1921 = vmatpush2.bf16.msra.mxu0 0
        %1922 = vmatprep.subr.bf16.mxu0 0
        %1923 = vmatpush2.bf16.msra.mxu0 0
        %1924 = vmatprep.subr.bf16.mxu0 0
        %1925 = vmatpush2.bf16.msra.mxu0 0
        %1926 = vmatprep.subr.bf16.mxu0 0
        %1927 = vmatpush2.bf16.msra.mxu0 0
        %1928 = vmatprep.subr.bf16.mxu0 0
        %1929 = vmatpush2.bf16.msra.mxu0 0
        %1930 = vmatprep.mubr.bf16.mxu0 0
        %1931 = vmatmul.mubr.bf16.gmra.mxu0 %v1896
        %v1932 = vpop.f32.mrf.mxu0
        %v1933 = vadd.f32 0.0, %v1932
        %v1934 = vpop.f32.mrf.mxu0
        %v1935 = vpop.f32.mrf.mxu0
        %v1936 = vpop.f32.mrf.mxu0
        %1937 = vdwg.mxu0
        %v1939 = vrot.slane %v1933, 4
        %v1941 = vadd.f32 %v1381, %v1939
        %v1942 = vxor.u32 %v1941, 2147483648
        %v1943 = vmul.f32 %v1942, 1.442695
        %v1944 = vpow.pop %v1943
        %v1945 = vadd.f32 %v1944, 1.0
        %v1946 = vrcp.pop %v1945
        %v1947 = vmul.f32 1.0, %v1946
        %v1948 = vtanh.pop %v1941
        %v1950 = vrot.slane %v1878, 6
        %v1952 = vmul.f32 %v1947, %v1950
        %1954 = vrot.lane.b32.xlu0 %v1948, 64
        %v1955 = vpop.permute.xlu0 %1954
        %v1957 = vmul.f32 %v1947, %v1955
        %1959 = vrot.lane.b32.xlu0 %v1957, 32
        %v1960 = vpop.permute.xlu0 %1959
        %v1962 = vadd.f32 %v1952, %v1960
        %v1963 = vtanh.pop %v1962
        %1965 = vrot.lane.b32.xlu0 %v1963, 64
        %v1966 = vpop.permute.xlu0 %1965
        %v1968 = vmul.f32 %v1947, %v1966
        %1970 = vrot.lane.b32.xlu0 %v1968, 32
        %v1971 = vpop.permute.xlu0 %1970
        %1973 = vst.msk [vmem:[#allocation2 + $0x8] sm:$0x30] %vm1639, %v1971
        %v1974 = vpack.c.bf16 %v1968, %v1968
        %v1976 = vrot.slane %v1974, 2
        %1977 = vrot.lane.b32.xlu0 %v1976, 32
        %v1978 = vpop.permute.xlu0 %1977
        %v1980 = vsel %vm553, %v1978, 0
        %1982 = vmatprep.subr.bf16.mxu0 0
        %1983 = vmatpush1.bf16.msra.mxu0 0
        %1984 = vmatprep.subr.bf16.mxu0 0
        %1985 = vmatpush1.bf16.msra.mxu0 0
        %1986 = vmatprep.subr.bf16.mxu0 0
        %1987 = vmatpush1.bf16.msra.mxu0 0
        %1988 = vmatprep.subr.bf16.mxu0 0
        %1989 = vmatpush1.bf16.msra.mxu0 0
        %1990 = vmatprep.subr.bf16.mxu0 0
        %1991 = vmatpush1.bf16.msra.mxu0 0
        %1992 = vmatprep.subr.bf16.mxu0 0
        %1993 = vmatpush1.bf16.msra.mxu0 0
        %1994 = vmatprep.subr.bf16.mxu0 0
        %1995 = vmatpush1.bf16.msra.mxu0 %v1395
        %1996 = vmatprep.subr.bf16.mxu0 0
        %1997 = vmatpush1.bf16.msra.mxu0 %v1394
        %1998 = vmatprep.subr.bf16.mxu0 0
        %1999 = vmatpush2.bf16.msra.mxu0 0
        %2000 = vmatprep.subr.bf16.mxu0 0
        %2001 = vmatpush2.bf16.msra.mxu0 0
        %2002 = vmatprep.subr.bf16.mxu0 0
        %2003 = vmatpush2.bf16.msra.mxu0 0
        %2004 = vmatprep.subr.bf16.mxu0 0
        %2005 = vmatpush2.bf16.msra.mxu0 0
        %2006 = vmatprep.subr.bf16.mxu0 0
        %2007 = vmatpush2.bf16.msra.mxu0 0
        %2008 = vmatprep.subr.bf16.mxu0 0
        %2009 = vmatpush2.bf16.msra.mxu0 0
        %2010 = vmatprep.subr.bf16.mxu0 0
        %2011 = vmatpush2.bf16.msra.mxu0 0
        %2012 = vmatprep.subr.bf16.mxu0 0
        %2013 = vmatpush2.bf16.msra.mxu0 0
        %2014 = vmatprep.mubr.bf16.mxu0 0
        %2015 = vmatmul.mubr.bf16.gmra.mxu0 %v1980
        %v2016 = vpop.f32.mrf.mxu0
        %v2017 = vadd.f32 0.0, %v2016
        %v2018 = vpop.f32.mrf.mxu0
        %v2019 = vpop.f32.mrf.mxu0
        %v2020 = vpop.f32.mrf.mxu0
        %2021 = vdwg.mxu0
        %v2023 = vrot.slane %v2017, 2
        %v2025 = vadd.f32 %v1381, %v2023
        %v2026 = vxor.u32 %v2025, 2147483648
        %v2027 = vmul.f32 %v2026, 1.442695
        %v2028 = vpow.pop %v2027
        %v2029 = vadd.f32 %v2028, 1.0
        %v2030 = vrcp.pop %v2029
        %v2031 = vmul.f32 1.0, %v2030
        %v2032 = vtanh.pop %v2025
        %v2034 = vrot.slane %v1962, 6
        %v2036 = vmul.f32 %v2031, %v2034
        %2038 = vrot.lane.b32.xlu0 %v2032, 64
        %v2039 = vpop.permute.xlu0 %2038
        %v2041 = vmul.f32 %v2031, %v2039
        %2043 = vrot.lane.b32.xlu0 %v2041, 32
        %v2044 = vpop.permute.xlu0 %2043
        %v2046 = vadd.f32 %v2036, %v2044
        %v2047 = vtanh.pop %v2046
        %2049 = vrot.lane.b32.xlu0 %v2047, 64
        %v2050 = vpop.permute.xlu0 %2049
        %v2052 = vmul.f32 %v2031, %v2050
        %2054 = vrot.lane.b32.xlu0 %v2052, 32
        %v2055 = vpop.permute.xlu0 %2054
        %2057 = vst.msk [vmem:[#allocation2 + $0x8] sm:$0xc0] %vm1724, %v2055
        %2058 = vst.msk [vmem:[#allocation3 - $0x6] sm:$0xc0] %vm1724, %v2055
        %v2059 = vld [vmem:[#allocation2] sm:$0xff]
        %v2060 = vld [vmem:[#allocation2 + $0x8] sm:$0xff]
        %2061 = vst.msk [vmem:[%s10] sm:$0xff] %vm553, %v2059
        %2062 = vst.msk [vmem:[%s10 + $0x8] sm:$0xff] %vm553, %v2060
        // Predicated region
        $region65: #{encoder_forward.1} parent=59 // pred_check
          %p2063 = pneg %p288
        $region66: #{encoder_forward.1} parent=59 // pred_check_branch
          %2065 = sbr.rel (%p2063) target = $region68
        $region67: #{encoder_forward.1} parent=59 // pred_region
          _
        $region68: #{encoder_forward.1} parent=59 // pred_fallthru
          _
        // Predicated region
        $region69: #{encoder_forward.1} parent=59 // pred_check
          %p2066 = pneg %p309
        $region70: #{encoder_forward.1} parent=59 // pred_check_branch
          %2068 = sbr.rel (%p2066) target = $region72
        $region71: #{encoder_forward.1} parent=59 // pred_region
          %s2070 = ssub.s32 32, 32
          %2071 = vsyncadd [#allocation4], %s2070
          %s2073 = sshll.u32 [#allocation3], 4
          %s2074 = int_to_ptr.vmem [resolvable:$true] %s2073
          %2076 = dma.vmem_to_hbm [thread:$0]  %s2074, 32, %s11, [#allocation4]
        $region72: #{encoder_forward.1} parent=59 // pred_fallthru
          _
        // Predicated region
        $region73: #{encoder_forward.1} parent=59 // pred_check
          %p2077 = pneg %p330
        $region74: #{encoder_forward.1} parent=59 // pred_check_branch
          %2079 = sbr.rel (%p2077) target = $region76
        $region75: #{encoder_forward.1} parent=59 // pred_region
          _
        $region76: #{encoder_forward.1} parent=59 // pred_fallthru
          _
        // Predicated region
        $region77: #{encoder_forward.1} parent=59 // pred_check
          %p2080 = pneg %p288
        $region78: #{encoder_forward.1} parent=59 // pred_check_branch
          %2082 = sbr.rel (%p2080) target = $region80
        $region79: #{encoder_forward.1} parent=59 // pred_region
          _
        $region80: #{encoder_forward.1} parent=59 // pred_fallthru
          _
        // Predicated region
        $region81: #{encoder_forward.1} parent=59 // pred_check
          %p2083 = pneg %p309
        $region82: #{encoder_forward.1} parent=59 // pred_check_branch
          %2085 = sbr.rel (%p2083) target = $region84
        $region83: #{encoder_forward.1} parent=59 // pred_region
          %2086 = dma.done [#allocation4], 32
        $region84: #{encoder_forward.1} parent=59 // pred_fallthru
          _
        // Predicated region
        $region85: #{encoder_forward.1} parent=59 // pred_check
          %p2087 = pneg %p330
        $region86: #{encoder_forward.1} parent=59 // pred_check_branch
          %2089 = sbr.rel (%p2087) target = $region88
        $region87: #{encoder_forward.1} parent=59 // pred_region
          _
        $region88: #{encoder_forward.1} parent=59 // pred_fallthru
          _
      $region60: #{encoder_forward.1} parent=5 // pred_fallthru
        _
      %p2090 = scmp.le.s32.totalorder 2, %s20
      // Predicated region
      $region89: #{encoder_forward.1} parent=5 // pred_check
        %p2091 = pneg %p2090
      $region90: #{encoder_forward.1} parent=5 // pred_check_branch
        %2093 = sbr.rel (%p2091) target = $region92
      $region91: #{encoder_forward.1} parent=5 // pred_region
        %s2094 = ssub.s32 %s20, 2
      $region92: #{encoder_forward.1} parent=5 // pred_fallthru
        _
    $region6: #{encoder_forward.1} parent=1 // loop_footer
      %s24 = sadd.s32 1, %s20
    $region7: #{encoder_forward.1} parent=1 // loop_footer_branch
      %19 = sbr.rel target = $region3
    $region8: #{encoder_forward.1} parent=1 // loop_exit
      _
    %2095 = vsyncpa [#allocation4], 1
    %s2096 = scalar_lea.sflag [#allocation4], 1
    %2097 = vsyncpa %s2096, 1

</llo_original>
